<compile_context>
chip_gen: v6e
topology: v6e:2x2x1
jax: 0.10.0
libtpu: 0.0.40
codegen_flags: <defaults>
</compile_context>

<pallas_src>
import jax
import jax.numpy as jnp
from jax import lax
from jax.experimental import pallas as pl
from jax.experimental.pallas import tpu as pltpu

KERNEL_SIZES = (2, 3, 4)
DILATION = 2


def _round_up(v, m):
    return (v + m - 1) // m * m


def textcnn_kernel(col_ref, wm_ref, mask_ref, bm_ref, fcw_ref, fcb_ref, o_ref):
    # col_ref : (TB, L, KTOT)  bf16   wrapper-side im2col (4 dilated taps)
    # wm_ref  : (KTOT, 3F)     bf16   merged conv weights (zero-padded taps)
    # mask_ref: (L, 3F)        f32    additive mask: 0 valid, -1e30 invalid
    # bm_ref  : (1, 3F)        f32    merged conv biases
    # fcw_ref : (3F, O_pad)    bf16   FC weight, output padded to 128 lanes
    # fcb_ref : (1, O_pad)     f32
    # o_ref   : (TB, O_pad)    f32
    TB, L, K = col_ref.shape
    NF3 = wm_ref.shape[1]

    # One lane-dense MXU matmul: (TB*L, K) x (K, 3F), f32 accumulation.
    x2d = col_ref[...].reshape(TB * L, K)
    acc = jnp.dot(x2d, wm_ref[...], preferred_element_type=jnp.float32)

    # Mask invalid time positions per kernel size (built from zero-padded taps)
    # so they cannot win the temporal max, then max-pool over time.
    acc3 = acc.reshape(TB, L, NF3) + mask_ref[...]          # (TB, L, 3F)
    pooled = jnp.max(acc3, axis=1)                          # (TB, 3F)

    # Bias + ReLU AFTER the max: exact because the bias is constant over time
    # and ReLU is monotone.  Keep f32 (v5e VPU has no bf16 path).
    feat = jnp.maximum(pooled + bm_ref[...], 0.0)           # (TB, 3F) f32

    # TODO(synk): Dropout(p=0.1) is identity in eval mode; training-mode RNG
    # dropout (pltpu.prng_seed / prng_random_bits) not implemented.
    out = jnp.dot(feat.astype(fcw_ref.dtype), fcw_ref[...],
                  preferred_element_type=jnp.float32)       # (TB, O_pad)
    o_ref[...] = jnp.maximum(out + fcb_ref[...], 0.0).astype(o_ref.dtype)


def textcnn_forward(x, params, block_b=None, compute_dtype=jnp.bfloat16):
    B, L, C = x.shape
    NF = params["b2"].shape[-1]
    O = params["fc_b"].shape[-1]
    max_ks = KERNEL_SIZES[-1]
    KTOT = max_ks * C                       # 4 * 32 = 128
    NF3 = len(KERNEL_SIZES) * NF            # 3 * 256 = 768
    O_pad = _round_up(max(O, 1), 128)       # lane-dense output store

    # ---- batch blocking --------------------------------------------------
    # Only split into >= 2 grid steps when each block carries real rows
    # (v7x megacore win); otherwise one block (no all-padding second step on
    # v5e/v6e's sequential grid).  block_b multiple of 8, capped at 128; at
    # that cap the per-step VMEM is ~7.5 MiB (col 2x0.5 MiB bf16 + acc 6 MiB
    # f32 + out/weights), well inside the 32 MiB scoped default on all gens
    # (v7x physical VMEM is 64 MiB).
    if block_b is None:
        if B >= 16:
            block_b = min(128, _round_up(pl.cdiv(B, 2), 8))
        else:
            block_b = _round_up(max(B, 1), 8)
    n_blocks = pl.cdiv(B, block_b)
    B_pad = n_blocks * block_b

    # ---- wrapper-side im2col (lane-dense) --------------------------------
    # Zero-pad time by DILATION*(max_ks-1)=6 so every tap slice has length L,
    # then concatenate the 4 dilated taps along channels -> (B, L, 128).
    pad_t = DILATION * (max_ks - 1)
    x_pad = jnp.pad(x.astype(compute_dtype),
                    ((0, B_pad - B), (0, pad_t), (0, 0)))
    taps = [x_pad[:, k * DILATION:k * DILATION + L, :] for k in range(max_ks)]
    x_col = jnp.concatenate(taps, axis=-1)                  # (B_pad, L, KTOT)

    # ---- merged conv weights / biases / temporal validity mask -----------
    w_merged = jnp.zeros((KTOT, NF3), jnp.float32)
    for i, ks in enumerate(KERNEL_SIZES):
        w_col = params[f"w{ks}"].reshape(ks * C, NF)        # (ks*C, F)
        w_merged = w_merged.at[:ks * C, i * NF:(i + 1) * NF].set(w_col)
    w_merged = w_merged.astype(compute_dtype)
    b_merged = jnp.concatenate(
        [params[f"b{ks}"] for ks in KERNEL_SIZES], axis=-1
    ).astype(jnp.float32)                                    # (1, 3F)

    t_idx = jnp.arange(L)[:, None]                           # (L, 1)
    l_out = jnp.concatenate(
        [jnp.full((NF,), L - DILATION * (ks - 1), jnp.int32)
         for ks in KERNEL_SIZES])                            # (3F,)
    neg_mask = jnp.where(t_idx < l_out[None, :], 0.0, -1e30).astype(jnp.float32)

    # ---- FC weights, output dim padded to 128 lanes ----------------------
    fc_w = jnp.zeros((NF3, O_pad), jnp.float32)
    fc_w = fc_w.at[:, :O].set(params["fc_w"]).astype(compute_dtype)
    fc_b = jnp.zeros((1, O_pad), jnp.float32).at[:, :O].set(params["fc_b"])

    operands = [x_col, w_merged, neg_mask, b_merged, fc_w, fc_b]
    in_specs = [
        pl.BlockSpec((block_b, L, KTOT), lambda b: (b, 0, 0)),
        pl.BlockSpec(w_merged.shape, lambda b: (0, 0)),
        pl.BlockSpec(neg_mask.shape, lambda b: (0, 0)),
        pl.BlockSpec(b_merged.shape, lambda b: (0, 0)),
        pl.BlockSpec(fc_w.shape, lambda b: (0, 0)),
        pl.BlockSpec(fc_b.shape, lambda b: (0, 0)),
    ]

    # Advisory cost estimate: weights counted ONCE (constant index_map keeps
    # them VMEM-resident across grid steps), per-step input is x_col.
    flops = 2 * B_pad * L * KTOT * NF3 + 2 * B_pad * NF3 * O_pad
    bytes_accessed = (int(x_col.size) * x_col.dtype.itemsize
                      + B_pad * O_pad * 4)
    for op in operands[1:]:
        bytes_accessed += int(op.size) * op.dtype.itemsize

    out = pl.pallas_call(
        textcnn_kernel,
        out_shape=jax.ShapeDtypeStruct((B_pad, O_pad), jnp.float32),
        grid=(n_blocks,),
        in_specs=in_specs,
        out_specs=pl.BlockSpec((block_b, O_pad), lambda b: (b, 0)),
        compiler_params=pltpu.CompilerParams(
            dimension_semantics=("parallel",)),
        cost_estimate=pl.CostEstimate(
            flops=flops, transcendentals=0, bytes_accessed=bytes_accessed),
    )(*operands)
    return out[:B, :O].astype(x.dtype)


def make_params(key, input_dim, output_dim, num_filters):
    ks_keys = jax.random.split(key, 8)
    params = {}
    for i, ks in enumerate(KERNEL_SIZES):
        # PyTorch Conv1d weight is (F, C, ks); we store (ks, C, F).
        w = jax.random.normal(ks_keys[2 * i], (ks, input_dim, num_filters),
                              jnp.float32) * 0.1
        b = jax.random.normal(ks_keys[2 * i + 1], (1, num_filters),
                              jnp.float32) * 0.1
        params[f"w{ks}"] = w
        params[f"b{ks}"] = b
    # PyTorch Linear weight is (O, 3F); we store (3F, O).
    params["fc_w"] = jax.random.normal(
        ks_keys[6], (num_filters * len(KERNEL_SIZES), output_dim),
        jnp.float32) * 0.1
    params["fc_b"] = jax.random.normal(ks_keys[7], (1, output_dim),
                                       jnp.float32) * 0.1
    return params


def reference_forward(x, params):
    """Pure-JAX f32 reference mirroring the PyTorch module (NCL conv path)."""
    xc = jnp.transpose(x, (0, 2, 1))  # (B, C, L) == x.transpose(1, 2) in torch
    feats = []
    for ks in KERNEL_SIZES:
        w = jnp.transpose(params[f"w{ks}"], (2, 1, 0))  # (F, C, ks) == OIH
        y = lax.conv_general_dilated(
            xc, w, window_strides=(1,), padding="VALID",
            rhs_dilation=(DILATION,), dimension_numbers=("NCH", "OIH", "NCH"))
        y = y + params[f"b{ks}"].reshape(1, -1, 1)
        y = jnp.maximum(y, 0.0)
        feats.append(jnp.max(y, axis=2))                # global max-pool over time
    feat = jnp.concatenate(feats, axis=1)               # (B, 3F)
    return jnp.maximum(feat @ params["fc_w"] + params["fc_b"], 0.0)


if __name__ == "__main__":
    B, L = 2, 16          # batch, sequence length
    INPUT_DIM = 32        # input_dim (embedding dim)
    OUTPUT_DIM = 16       # output_dim
    NUM_FILTERS = 256     # module default

    key = jax.random.PRNGKey(0)
    kx, kp = jax.random.split(key)
    x = jax.random.normal(kx, (B, L, INPUT_DIM), jnp.float32)
    params = make_params(kp, INPUT_DIM, OUTPUT_DIM, NUM_FILTERS)

    out = jax.block_until_ready(textcnn_forward(x, params))
    ref = jax.block_until_ready(reference_forward(x, params))

    assert out.shape == (B, OUTPUT_DIM)
    # bf16 matmul inputs with f32 accumulation (inference-grade) -> looser
    # tolerance than a pure-f32 comparison; wrong semantics would be off by
    # O(1).  Pass compute_dtype=jnp.float32 for a tighter match.
    assert jnp.allclose(out, ref, rtol=2e-2, atol=2e-2), "mismatch vs reference"

    print("KERNEL_OK")
</pallas_src>

<mosaic_0001>
module attributes {stable_mosaic.version = 11 : i64} {
  func.func @textcnn_kernel(%arg0: i32, %arg1: memref<8x16x128xbf16, #tpu.memory_space<vmem>>, %arg2: memref<128x768xbf16, #tpu.memory_space<vmem>>, %arg3: memref<16x768xf32, #tpu.memory_space<vmem>>, %arg4: memref<1x768xf32, #tpu.memory_space<vmem>>, %arg5: memref<768x128xbf16, #tpu.memory_space<vmem>>, %arg6: memref<1x128xf32, #tpu.memory_space<vmem>>, %arg7: memref<8x128xf32, #tpu.memory_space<vmem>>) attributes {dimension_semantics = [#tpu.dimension_semantics<parallel>], iteration_bounds = array<i64: 1>, scalar_prefetch = 0 : i64, scratch_operands = 0 : i64, tpu.core_type = #tpu.core_type<tc>, window_params = [{transform_indices = @transform_0, window_bounds = array<i64: 8, 16, 128>}, {pipeline_mode = #tpu.pipeline_mode<synchronous>, transform_indices = @transform_1, window_bounds = array<i64: 128, 768>}, {pipeline_mode = #tpu.pipeline_mode<synchronous>, transform_indices = @transform_2, window_bounds = array<i64: 16, 768>}, {pipeline_mode = #tpu.pipeline_mode<synchronous>, transform_indices = @transform_3, window_bounds = array<i64: 1, 768>}, {pipeline_mode = #tpu.pipeline_mode<synchronous>, transform_indices = @transform_4, window_bounds = array<i64: 768, 128>}, {pipeline_mode = #tpu.pipeline_mode<synchronous>, transform_indices = @transform_5, window_bounds = array<i64: 1, 128>}, {transform_indices = @transform_6, window_bounds = array<i64: 8, 128>}]} {
    %c0 = arith.constant 0 : index
    %c0_0 = arith.constant 0 : index
    %c0_1 = arith.constant 0 : index
    %0 = vector.load %arg1[%c0, %c0_0, %c0_1] : memref<8x16x128xbf16, #tpu.memory_space<vmem>>, vector<8x16x128xbf16>
    %1 = vector.shape_cast %0 : vector<8x16x128xbf16> to vector<128x128xbf16>
    %c0_2 = arith.constant 0 : index
    %c0_3 = arith.constant 0 : index
    %2 = vector.load %arg2[%c0_2, %c0_3] : memref<128x768xbf16, #tpu.memory_space<vmem>>, vector<128x768xbf16>
    %cst = arith.constant dense<0.000000e+00> : vector<128x768xf32>
    %3 = tpu.matmul %1, %2, %cst {dimension_numbers = #tpu.dot_dimension_numbers<[1], [0], [0], [1], [0, 0, 1, 1], [], []>} : vector<128x128xbf16>, vector<128x768xbf16>, vector<128x768xf32> -> vector<128x768xf32>
    %4 = vector.shape_cast %3 : vector<128x768xf32> to vector<8x16x768xf32>
    %c0_4 = arith.constant 0 : index
    %c0_5 = arith.constant 0 : index
    %5 = vector.load %arg3[%c0_4, %c0_5] : memref<16x768xf32, #tpu.memory_space<vmem>>, vector<16x768xf32>
    %6 = vector.shape_cast %5 : vector<16x768xf32> to vector<1x16x768xf32>
    %7 = vector.broadcast %6 : vector<1x16x768xf32> to vector<8x16x768xf32>
    %8 = arith.addf %4, %7 : vector<8x16x768xf32>
    %cst_6 = arith.constant dense<0xFF800000> : vector<8x768xf32>
    %9 = vector.multi_reduction <maximumf>, %8, %cst_6 [1] : vector<8x16x768xf32> to vector<8x768xf32>
    %c0_7 = arith.constant 0 : index
    %c0_8 = arith.constant 0 : index
    %10 = vector.load %arg4[%c0_7, %c0_8] : memref<1x768xf32, #tpu.memory_space<vmem>>, vector<1x768xf32>
    %11 = vector.broadcast %10 : vector<1x768xf32> to vector<8x768xf32>
    %12 = arith.addf %9, %11 : vector<8x768xf32>
    %cst_9 = arith.constant 0.000000e+00 : f32
    %13 = vector.broadcast %cst_9 : f32 to vector<8x768xf32>
    %14 = arith.maximumf %12, %13 : vector<8x768xf32>
    %15 = arith.truncf %14 : vector<8x768xf32> to vector<8x768xbf16>
    %c0_10 = arith.constant 0 : index
    %c0_11 = arith.constant 0 : index
    %16 = vector.load %arg5[%c0_10, %c0_11] : memref<768x128xbf16, #tpu.memory_space<vmem>>, vector<768x128xbf16>
    %cst_12 = arith.constant dense<0.000000e+00> : vector<8x128xf32>
    %17 = tpu.matmul %15, %16, %cst_12 {dimension_numbers = #tpu.dot_dimension_numbers<[1], [0], [0], [1], [0, 0, 1, 1], [], []>} : vector<8x768xbf16>, vector<768x128xbf16>, vector<8x128xf32> -> vector<8x128xf32>
    %c0_13 = arith.constant 0 : index
    %c0_14 = arith.constant 0 : index
    %18 = vector.load %arg6[%c0_13, %c0_14] : memref<1x128xf32, #tpu.memory_space<vmem>>, vector<1x128xf32>
    %19 = vector.broadcast %18 : vector<1x128xf32> to vector<8x128xf32>
    %20 = arith.addf %17, %19 : vector<8x128xf32>
    %cst_15 = arith.constant 0.000000e+00 : f32
    %21 = vector.broadcast %cst_15 : f32 to vector<8x128xf32>
    %22 = arith.maximumf %20, %21 : vector<8x128xf32>
    %c0_16 = arith.constant 0 : index
    %c0_17 = arith.constant 0 : index
    %23 = vector.load %arg7[%c0_16, %c0_17] : memref<8x128xf32, #tpu.memory_space<vmem>>, vector<8x128xf32>
    tpu.vector_store %arg7[%c0_16, %c0_17], %22 {strides = array<i32>} : memref<8x128xf32, #tpu.memory_space<vmem>>, vector<8x128xf32>,
    return
  }
  func.func @transform_0(%arg0: i32) -> (i32, i32, i32) {
    %c0_i32 = arith.constant 0 : i32
    %c0_i32_0 = arith.constant 0 : i32
    %c0_i32_1 = arith.constant 0 : i32
    return %arg0, %c0_i32, %c0_i32_0 : i32, i32, i32
  }
  func.func @transform_1(%arg0: i32) -> (i32, i32) {
    %c0_i32 = arith.constant 0 : i32
    %c0_i32_0 = arith.constant 0 : i32
    %c0_i32_1 = arith.constant 0 : i32
    return %c0_i32, %c0_i32_0 : i32, i32
  }
  func.func @transform_2(%arg0: i32) -> (i32, i32) {
    %c0_i32 = arith.constant 0 : i32
    %c0_i32_0 = arith.constant 0 : i32
    %c0_i32_1 = arith.constant 0 : i32
    return %c0_i32, %c0_i32_0 : i32, i32
  }
  func.func @transform_3(%arg0: i32) -> (i32, i32) {
    %c0_i32 = arith.constant 0 : i32
    %c0_i32_0 = arith.constant 0 : i32
    %c0_i32_1 = arith.constant 0 : i32
    return %c0_i32, %c0_i32_0 : i32, i32
  }
  func.func @transform_4(%arg0: i32) -> (i32, i32) {
    %c0_i32 = arith.constant 0 : i32
    %c0_i32_0 = arith.constant 0 : i32
    %c0_i32_1 = arith.constant 0 : i32
    return %c0_i32, %c0_i32_0 : i32, i32
  }
  func.func @transform_5(%arg0: i32) -> (i32, i32) {
    %c0_i32 = arith.constant 0 : i32
    %c0_i32_0 = arith.constant 0 : i32
    %c0_i32_1 = arith.constant 0 : i32
    return %c0_i32, %c0_i32_0 : i32, i32
  }
  func.func @transform_6(%arg0: i32) -> (i32, i32) {
    %c0_i32 = arith.constant 0 : i32
    %c0_i32_0 = arith.constant 0 : i32
    return %arg0, %c0_i32 : i32, i32
  }
}

</mosaic_0001>

<llo_original>
// kernel: tpu_custom_call.1
$region0: #{tpu_custom_call.1}
  #allocation0 [shape = 'u32[]', space=smem, size = 0x4, offset = 0x4, fixed_abs, tag = 'smem constant byte address 0x4 - core index']
  #allocation1 [shape = 'u32[144,128]{1,0:T(1,128)}', space=vmem, size = 0x12000, scoped, tag = 'internal scratch']
  %s0 = inlined_call_operand.hbm [shape: bf16[8,16,128], index: 0, kind: input, shape index: {}]
  %s1 = inlined_call_operand.hbm [shape: bf16[128,768], index: 1, kind: input, shape index: {}]
  %s2 = inlined_call_operand.hbm [shape: f32[16,768], index: 2, kind: input, shape index: {}]
  %s3 = inlined_call_operand.hbm [shape: f32[1,768], index: 3, kind: input, shape index: {}]
  %s4 = inlined_call_operand.hbm [shape: bf16[768,128], index: 4, kind: input, shape index: {}]
  %s5 = inlined_call_operand.vmem [shape: f32[1,128], index: 5, kind: input, shape index: {}]
  %s6 = inlined_call_operand.hbm [shape: f32[8,128], index: 6, kind: output, shape index: {}]
  %s7 = sld [smem:[#allocation0]]
  $region54: #{tpu_custom_call.1} parent=0
    _
  %s9 = ssub.s32 1, %s7
  %s10 = scalar_select 0, %s9, %s7
  $region1: #{tpu_custom_call.1} parent=0
    #allocation2 [shape = 'u8[32768]{0}', space=vmem, size = 0x8000, scoped, tag = 'input window, operand 0, single buffered']
    #allocation3 [shape = 's32[1]{0}', space=sflag, size = 0x4, scoped, tag = 'scoped memory for tpu_custom_call.1']
    #allocation4 [shape = 's32[1]{0}', space=sflag, size = 0x4, scoped, tag = 'scoped memory for tpu_custom_call.1']
    #allocation5 [shape = 'u8[196608]{0}', space=vmem, size = 0x30000, scoped, tag = 'input window, operand 1, single buffered']
    #allocation6 [shape = 's32[1]{0}', space=sflag, size = 0x4, scoped, tag = 'scoped memory for tpu_custom_call.1']
    #allocation7 [shape = 'u8[49152]{0}', space=vmem, size = 0xc000, scoped, tag = 'input window, operand 2, single buffered']
    #allocation8 [shape = 'u8[3072]{0}', space=vmem, size = 0xc00, scoped, tag = 'input window, operand 3, single buffered']
    #allocation9 [shape = 's32[1]{0}', space=sflag, size = 0x4, scoped, tag = 'scoped memory for tpu_custom_call.1']
    #allocation10 [shape = 'u8[196608]{0}', space=vmem, size = 0x30000, scoped, tag = 'input window, operand 4, single buffered']
    #allocation11 [shape = 'u8[4096]{0}', space=vmem, size = 0x1000, scoped, tag = 'output window, operand 0, single buffered']
    %11 = vsyncpa [#allocation3], 0
    %12 = vsyncpa [#allocation6], 0
    %13 = vsyncpa [#allocation9], 0
    %14 = vsyncpa [#allocation4], 0
    // Predicated region
    $region2: #{tpu_custom_call.1} parent=1 // pred_check
      _
    $region3: #{tpu_custom_call.1} parent=1 // pred_check_branch
      %16 = sbr.rel (0) target = $region5
    $region4: #{tpu_custom_call.1} parent=1 // pred_region
      %s18 = ssub.s32 1024, 1024
      %19 = vsyncadd [#allocation3], %s18
      %s20 = sshll.u32 [#allocation2], 4
      %s21 = int_to_ptr.vmem [resolvable:$true] %s20
      %26 = dma.hbm_to_vmem [thread:$0]  %s0, 1024, %s21, [#allocation3], 64, 64, 4
    $region5: #{tpu_custom_call.1} parent=1 // pred_fallthru
      _
    // Predicated region
    $region6: #{tpu_custom_call.1} parent=1 // pred_check
      _
    $region7: #{tpu_custom_call.1} parent=1 // pred_check_branch
      %28 = sbr.rel (0) target = $region9
    $region8: #{tpu_custom_call.1} parent=1 // pred_region
      %s30 = ssub.s32 6144, 6144
      %31 = vsyncadd [#allocation6], %s30
      %s32 = sshll.u32 [#allocation5], 4
      %s33 = int_to_ptr.vmem [resolvable:$true] %s32
      %38 = dma.hbm_to_vmem [thread:$0]  %s1, 6144, %s33, [#allocation6], 384, 384, 24
    $region9: #{tpu_custom_call.1} parent=1 // pred_fallthru
      _
    // Predicated region
    $region10: #{tpu_custom_call.1} parent=1 // pred_check
      _
    $region11: #{tpu_custom_call.1} parent=1 // pred_check_branch
      %40 = sbr.rel (0) target = $region13
    $region12: #{tpu_custom_call.1} parent=1 // pred_region
      %s42 = ssub.s32 1536, 1536
      %43 = vsyncadd [#allocation6], %s42
      %s44 = sshll.u32 [#allocation7], 4
      %s45 = int_to_ptr.vmem [resolvable:$true] %s44
      %50 = dma.hbm_to_vmem [thread:$0]  %s2, 1536, %s45, [#allocation6], 768, 768, 48
    $region13: #{tpu_custom_call.1} parent=1 // pred_fallthru
      _
    // Predicated region
    $region14: #{tpu_custom_call.1} parent=1 // pred_check
      _
    $region15: #{tpu_custom_call.1} parent=1 // pred_check_branch
      %52 = sbr.rel (0) target = $region17
    $region16: #{tpu_custom_call.1} parent=1 // pred_region
      %s54 = ssub.s32 96, 96
      %55 = vsyncadd [#allocation9], %s54
      %s57 = sshll.u32 [#allocation8], 4
      %s58 = int_to_ptr.vmem [resolvable:$true] %s57
      %60 = dma.hbm_to_vmem [thread:$0]  %s3, 96, %s58, [#allocation9]
    $region17: #{tpu_custom_call.1} parent=1 // pred_fallthru
      _
    // Predicated region
    $region18: #{tpu_custom_call.1} parent=1 // pred_check
      _
    $region19: #{tpu_custom_call.1} parent=1 // pred_check_branch
      %62 = sbr.rel (0) target = $region21
    $region20: #{tpu_custom_call.1} parent=1 // pred_region
      %s64 = ssub.s32 6144, 6144
      %65 = vsyncadd [#allocation9], %s64
      %s66 = sshll.u32 [#allocation10], 4
      %s67 = int_to_ptr.vmem [resolvable:$true] %s66
      %72 = dma.hbm_to_vmem [thread:$0]  %s4, 6144, %s67, [#allocation9], 64, 64, 4
    $region21: #{tpu_custom_call.1} parent=1 // pred_fallthru
      _
    // Predicated region
    $region22: #{tpu_custom_call.1} parent=1 // pred_check
      _
    $region23: #{tpu_custom_call.1} parent=1 // pred_check_branch
      %74 = sbr.rel (0) target = $region25
    $region24: #{tpu_custom_call.1} parent=1 // pred_region
      _
    $region25: #{tpu_custom_call.1} parent=1 // pred_fallthru
      _
    // Predicated region
    $region26: #{tpu_custom_call.1} parent=1 // pred_check
      _
    $region27: #{tpu_custom_call.1} parent=1 // pred_check_branch
      %76 = sbr.rel (0) target = $region29
    $region28: #{tpu_custom_call.1} parent=1 // pred_region
      %77 = dma.done [#allocation3], 1024
    $region29: #{tpu_custom_call.1} parent=1 // pred_fallthru
      _
    // Predicated region
    $region30: #{tpu_custom_call.1} parent=1 // pred_check
      _
    $region31: #{tpu_custom_call.1} parent=1 // pred_check_branch
      %79 = sbr.rel (0) target = $region33
    $region32: #{tpu_custom_call.1} parent=1 // pred_region
      %80 = dma.done [#allocation6], 6144
    $region33: #{tpu_custom_call.1} parent=1 // pred_fallthru
      _
    // Predicated region
    $region34: #{tpu_custom_call.1} parent=1 // pred_check
      _
    $region35: #{tpu_custom_call.1} parent=1 // pred_check_branch
      %82 = sbr.rel (0) target = $region37
    $region36: #{tpu_custom_call.1} parent=1 // pred_region
      %83 = dma.done [#allocation6], 1536
    $region37: #{tpu_custom_call.1} parent=1 // pred_fallthru
      _
    // Predicated region
    $region38: #{tpu_custom_call.1} parent=1 // pred_check
      _
    $region39: #{tpu_custom_call.1} parent=1 // pred_check_branch
      %85 = sbr.rel (0) target = $region41
    $region40: #{tpu_custom_call.1} parent=1 // pred_region
      %86 = dma.done [#allocation9], 96
    $region41: #{tpu_custom_call.1} parent=1 // pred_fallthru
      _
    // Predicated region
    $region42: #{tpu_custom_call.1} parent=1 // pred_check
      _
    $region43: #{tpu_custom_call.1} parent=1 // pred_check_branch
      %88 = sbr.rel (0) target = $region45
    $region44: #{tpu_custom_call.1} parent=1 // pred_region
      %89 = dma.done [#allocation9], 6144
    $region45: #{tpu_custom_call.1} parent=1 // pred_fallthru
      _
    %v91 = vld [vmem:[#allocation2] sm:$0xf]
    %v92 = vld [vmem:[#allocation2 + $0x4] sm:$0xf]
    %v93 = vld [vmem:[#allocation2 + $0x8] sm:$0xf]
    %v94 = vld [vmem:[#allocation2 + $0xc] sm:$0xf]
    %v95 = vld [vmem:[#allocation2 + $0x10] sm:$0xf]
    %v96 = vld [vmem:[#allocation2 + $0x14] sm:$0xf]
    %v97 = vld [vmem:[#allocation2 + $0x18] sm:$0xf]
    %v98 = vld [vmem:[#allocation2 + $0x1c] sm:$0xf]
    %v99 = vld [vmem:[#allocation2 + $0x20] sm:$0xf]
    %v100 = vld [vmem:[#allocation2 + $0x24] sm:$0xf]
    %v101 = vld [vmem:[#allocation2 + $0x28] sm:$0xf]
    %v102 = vld [vmem:[#allocation2 + $0x2c] sm:$0xf]
    %v103 = vld [vmem:[#allocation2 + $0x30] sm:$0xf]
    %v104 = vld [vmem:[#allocation2 + $0x34] sm:$0xf]
    %v105 = vld [vmem:[#allocation2 + $0x38] sm:$0xf]
    %v106 = vld [vmem:[#allocation2 + $0x3c] sm:$0xf]
    %v107 = vld [vmem:[#allocation5] sm:$0xff]
    %v108 = vld [vmem:[#allocation5 + $0x8] sm:$0xff]
    %v109 = vld [vmem:[#allocation5 + $0x10] sm:$0xff]
    %v110 = vld [vmem:[#allocation5 + $0x18] sm:$0xff]
    %v111 = vld [vmem:[#allocation5 + $0x20] sm:$0xff]
    %v112 = vld [vmem:[#allocation5 + $0x28] sm:$0xff]
    %v113 = vld [vmem:[#allocation5 + $0x30] sm:$0xff]
    %v114 = vld [vmem:[#allocation5 + $0x38] sm:$0xff]
    %v115 = vld [vmem:[#allocation5 + $0x40] sm:$0xff]
    %v116 = vld [vmem:[#allocation5 + $0x48] sm:$0xff]
    %v117 = vld [vmem:[#allocation5 + $0x50] sm:$0xff]
    %v118 = vld [vmem:[#allocation5 + $0x58] sm:$0xff]
    %v119 = vld [vmem:[#allocation5 + $0x60] sm:$0xff]
    %v120 = vld [vmem:[#allocation5 + $0x68] sm:$0xff]
    %v121 = vld [vmem:[#allocation5 + $0x70] sm:$0xff]
    %v122 = vld [vmem:[#allocation5 + $0x78] sm:$0xff]
    %v123 = vld [vmem:[#allocation5 + $0x80] sm:$0xff]
    %v124 = vld [vmem:[#allocation5 + $0x88] sm:$0xff]
    %v125 = vld [vmem:[#allocation5 + $0x90] sm:$0xff]
    %v126 = vld [vmem:[#allocation5 + $0x98] sm:$0xff]
    %v127 = vld [vmem:[#allocation5 + $0xa0] sm:$0xff]
    %v128 = vld [vmem:[#allocation5 + $0xa8] sm:$0xff]
    %v129 = vld [vmem:[#allocation5 + $0xb0] sm:$0xff]
    %v130 = vld [vmem:[#allocation5 + $0xb8] sm:$0xff]
    %v131 = vld [vmem:[#allocation5 + $0xc0] sm:$0xff]
    %v132 = vld [vmem:[#allocation5 + $0xc8] sm:$0xff]
    %v133 = vld [vmem:[#allocation5 + $0xd0] sm:$0xff]
    %v134 = vld [vmem:[#allocation5 + $0xd8] sm:$0xff]
    %v135 = vld [vmem:[#allocation5 + $0xe0] sm:$0xff]
    %v136 = vld [vmem:[#allocation5 + $0xe8] sm:$0xff]
    %v137 = vld [vmem:[#allocation5 + $0xf0] sm:$0xff]
    %v138 = vld [vmem:[#allocation5 + $0xf8] sm:$0xff]
    %v139 = vld [vmem:[#allocation5 + $0x100] sm:$0xff]
    %v140 = vld [vmem:[#allocation5 + $0x108] sm:$0xff]
    %v141 = vld [vmem:[#allocation5 + $0x110] sm:$0xff]
    %v142 = vld [vmem:[#allocation5 + $0x118] sm:$0xff]
    %v143 = vld [vmem:[#allocation5 + $0x120] sm:$0xff]
    %v144 = vld [vmem:[#allocation5 + $0x128] sm:$0xff]
    %v145 = vld [vmem:[#allocation5 + $0x130] sm:$0xff]
    %v146 = vld [vmem:[#allocation5 + $0x138] sm:$0xff]
    %v147 = vld [vmem:[#allocation5 + $0x140] sm:$0xff]
    %v148 = vld [vmem:[#allocation5 + $0x148] sm:$0xff]
    %v149 = vld [vmem:[#allocation5 + $0x150] sm:$0xff]
    %v150 = vld [vmem:[#allocation5 + $0x158] sm:$0xff]
    %v151 = vld [vmem:[#allocation5 + $0x160] sm:$0xff]
    %v152 = vld [vmem:[#allocation5 + $0x168] sm:$0xff]
    %v153 = vld [vmem:[#allocation5 + $0x170] sm:$0xff]
    %v154 = vld [vmem:[#allocation5 + $0x178] sm:$0xff]
    %v171 = vunpack.c.l.b16 %v91
    %v172 = vunpack.c.l.b16 %v92
    %v173 = vunpack.c.l.b16 %v93
    %v174 = vunpack.c.l.b16 %v94
    %v175 = vunpack.c.l.b16 %v95
    %v176 = vunpack.c.l.b16 %v96
    %v177 = vunpack.c.l.b16 %v97
    %v178 = vunpack.c.l.b16 %v98
    %v179 = vunpack.c.l.b16 %v99
    %v180 = vunpack.c.l.b16 %v100
    %v181 = vunpack.c.l.b16 %v101
    %v182 = vunpack.c.l.b16 %v102
    %v183 = vunpack.c.l.b16 %v103
    %v184 = vunpack.c.l.b16 %v104
    %v185 = vunpack.c.l.b16 %v105
    %v186 = vunpack.c.l.b16 %v106
    %v187 = vpack.c.b16 %v172, %v171
    %v188 = vpack.c.b16 %v174, %v173
    %v189 = vpack.c.b16 %v176, %v175
    %v190 = vpack.c.b16 %v178, %v177
    %v191 = vpack.c.b16 %v180, %v179
    %v192 = vpack.c.b16 %v182, %v181
    %v193 = vpack.c.b16 %v184, %v183
    %v194 = vpack.c.b16 %v186, %v185
    %v251 = vunpack.c.l.b16 %v107
    %v252 = vunpack.c.h.b16 %v107
    %v253 = vunpack.c.l.b16 %v108
    %v254 = vunpack.c.h.b16 %v108
    %v255 = vunpack.c.l.b16 %v109
    %v256 = vunpack.c.h.b16 %v109
    %v257 = vunpack.c.l.b16 %v110
    %v258 = vunpack.c.h.b16 %v110
    %v259 = vunpack.c.l.b16 %v111
    %v260 = vunpack.c.h.b16 %v111
    %v261 = vunpack.c.l.b16 %v112
    %v262 = vunpack.c.h.b16 %v112
    %v263 = vunpack.c.l.b16 %v113
    %v264 = vunpack.c.h.b16 %v113
    %v265 = vunpack.c.l.b16 %v114
    %v266 = vunpack.c.h.b16 %v114
    %v267 = vunpack.c.l.b16 %v115
    %v268 = vunpack.c.h.b16 %v115
    %v269 = vunpack.c.l.b16 %v116
    %v270 = vunpack.c.h.b16 %v116
    %v271 = vunpack.c.l.b16 %v117
    %v272 = vunpack.c.h.b16 %v117
    %v273 = vunpack.c.l.b16 %v118
    %v274 = vunpack.c.h.b16 %v118
    %v275 = vunpack.c.l.b16 %v119
    %v276 = vunpack.c.h.b16 %v119
    %v277 = vunpack.c.l.b16 %v120
    %v278 = vunpack.c.h.b16 %v120
    %v279 = vunpack.c.l.b16 %v121
    %v280 = vunpack.c.h.b16 %v121
    %v281 = vunpack.c.l.b16 %v122
    %v282 = vunpack.c.h.b16 %v122
    %v283 = vunpack.c.l.b16 %v123
    %v284 = vunpack.c.h.b16 %v123
    %v285 = vunpack.c.l.b16 %v124
    %v286 = vunpack.c.h.b16 %v124
    %v287 = vunpack.c.l.b16 %v125
    %v288 = vunpack.c.h.b16 %v125
    %v289 = vunpack.c.l.b16 %v126
    %v290 = vunpack.c.h.b16 %v126
    %v291 = vunpack.c.l.b16 %v127
    %v292 = vunpack.c.h.b16 %v127
    %v293 = vunpack.c.l.b16 %v128
    %v294 = vunpack.c.h.b16 %v128
    %v295 = vunpack.c.l.b16 %v129
    %v296 = vunpack.c.h.b16 %v129
    %v297 = vunpack.c.l.b16 %v130
    %v298 = vunpack.c.h.b16 %v130
    %v299 = vunpack.c.l.b16 %v131
    %v300 = vunpack.c.h.b16 %v131
    %v301 = vunpack.c.l.b16 %v132
    %v302 = vunpack.c.h.b16 %v132
    %v303 = vunpack.c.l.b16 %v133
    %v304 = vunpack.c.h.b16 %v133
    %v305 = vunpack.c.l.b16 %v134
    %v306 = vunpack.c.h.b16 %v134
    %v307 = vunpack.c.l.b16 %v135
    %v308 = vunpack.c.h.b16 %v135
    %v309 = vunpack.c.l.b16 %v136
    %v310 = vunpack.c.h.b16 %v136
    %v311 = vunpack.c.l.b16 %v137
    %v312 = vunpack.c.h.b16 %v137
    %v313 = vunpack.c.l.b16 %v138
    %v314 = vunpack.c.h.b16 %v138
    %v315 = vunpack.c.l.b16 %v139
    %v316 = vunpack.c.h.b16 %v139
    %v317 = vunpack.c.l.b16 %v140
    %v318 = vunpack.c.h.b16 %v140
    %v319 = vunpack.c.l.b16 %v141
    %v320 = vunpack.c.h.b16 %v141
    %v321 = vunpack.c.l.b16 %v142
    %v322 = vunpack.c.h.b16 %v142
    %v323 = vunpack.c.l.b16 %v143
    %v324 = vunpack.c.h.b16 %v143
    %v325 = vunpack.c.l.b16 %v144
    %v326 = vunpack.c.h.b16 %v144
    %v327 = vunpack.c.l.b16 %v145
    %v328 = vunpack.c.h.b16 %v145
    %v329 = vunpack.c.l.b16 %v146
    %v330 = vunpack.c.h.b16 %v146
    %v331 = vunpack.c.l.b16 %v147
    %v332 = vunpack.c.h.b16 %v147
    %v333 = vunpack.c.l.b16 %v148
    %v334 = vunpack.c.h.b16 %v148
    %v335 = vunpack.c.l.b16 %v149
    %v336 = vunpack.c.h.b16 %v149
    %v337 = vunpack.c.l.b16 %v150
    %v338 = vunpack.c.h.b16 %v150
    %v339 = vunpack.c.l.b16 %v151
    %v340 = vunpack.c.h.b16 %v151
    %v341 = vunpack.c.l.b16 %v152
    %v342 = vunpack.c.h.b16 %v152
    %v343 = vunpack.c.l.b16 %v153
    %v344 = vunpack.c.h.b16 %v153
    %v345 = vunpack.c.l.b16 %v154
    %v346 = vunpack.c.h.b16 %v154
    %v347 = vpack.c.b16 %v257, %v251
    %v348 = vpack.c.b16 %v258, %v252
    %v349 = vpack.c.b16 %v259, %v253
    %v350 = vpack.c.b16 %v260, %v254
    %v351 = vpack.c.b16 %v261, %v255
    %v352 = vpack.c.b16 %v262, %v256
    %v353 = vpack.c.b16 %v269, %v263
    %v354 = vpack.c.b16 %v270, %v264
    %v355 = vpack.c.b16 %v271, %v265
    %v356 = vpack.c.b16 %v272, %v266
    %v357 = vpack.c.b16 %v273, %v267
    %v358 = vpack.c.b16 %v274, %v268
    %v359 = vpack.c.b16 %v281, %v275
    %v360 = vpack.c.b16 %v282, %v276
    %v361 = vpack.c.b16 %v283, %v277
    %v362 = vpack.c.b16 %v284, %v278
    %v363 = vpack.c.b16 %v285, %v279
    %v364 = vpack.c.b16 %v286, %v280
    %v365 = vpack.c.b16 %v293, %v287
    %v366 = vpack.c.b16 %v294, %v288
    %v367 = vpack.c.b16 %v295, %v289
    %v368 = vpack.c.b16 %v296, %v290
    %v369 = vpack.c.b16 %v297, %v291
    %v370 = vpack.c.b16 %v298, %v292
    %v371 = vpack.c.b16 %v305, %v299
    %v372 = vpack.c.b16 %v306, %v300
    %v373 = vpack.c.b16 %v307, %v301
    %v374 = vpack.c.b16 %v308, %v302
    %v375 = vpack.c.b16 %v309, %v303
    %v376 = vpack.c.b16 %v310, %v304
    %v377 = vpack.c.b16 %v317, %v311
    %v378 = vpack.c.b16 %v318, %v312
    %v379 = vpack.c.b16 %v319, %v313
    %v380 = vpack.c.b16 %v320, %v314
    %v381 = vpack.c.b16 %v321, %v315
    %v382 = vpack.c.b16 %v322, %v316
    %v383 = vpack.c.b16 %v329, %v323
    %v384 = vpack.c.b16 %v330, %v324
    %v385 = vpack.c.b16 %v331, %v325
    %v386 = vpack.c.b16 %v332, %v326
    %v387 = vpack.c.b16 %v333, %v327
    %v388 = vpack.c.b16 %v334, %v328
    %v389 = vpack.c.b16 %v341, %v335
    %v390 = vpack.c.b16 %v342, %v336
    %v391 = vpack.c.b16 %v343, %v337
    %v392 = vpack.c.b16 %v344, %v338
    %v393 = vpack.c.b16 %v345, %v339
    %v394 = vpack.c.b16 %v346, %v340
    %443 = vmatprep.subr.bf16.mxu0 %v390
    %444 = vmatpush1.bf16.msra.mxu0 %v389
    %445 = vmatprep.subr.bf16.mxu0 %v384
    %446 = vmatpush1.bf16.msra.mxu0 %v383
    %447 = vmatprep.subr.bf16.mxu0 %v378
    %448 = vmatpush1.bf16.msra.mxu0 %v377
    %449 = vmatprep.subr.bf16.mxu0 %v372
    %450 = vmatpush1.bf16.msra.mxu0 %v371
    %451 = vmatprep.subr.bf16.mxu0 %v366
    %452 = vmatpush1.bf16.msra.mxu0 %v365
    %453 = vmatprep.subr.bf16.mxu0 %v360
    %454 = vmatpush1.bf16.msra.mxu0 %v359
    %455 = vmatprep.subr.bf16.mxu0 %v354
    %456 = vmatpush1.bf16.msra.mxu0 %v353
    %457 = vmatprep.subr.bf16.mxu0 %v348
    %458 = vmatpush1.bf16.msra.mxu0 %v347
    %459 = vmatprep.subr.bf16.mxu0 0
    %460 = vmatpush2.bf16.msra.mxu0 0
    %461 = vmatprep.subr.bf16.mxu0 0
    %462 = vmatpush2.bf16.msra.mxu0 0
    %463 = vmatprep.subr.bf16.mxu0 0
    %464 = vmatpush2.bf16.msra.mxu0 0
    %465 = vmatprep.subr.bf16.mxu0 0
    %466 = vmatpush2.bf16.msra.mxu0 0
    %467 = vmatprep.subr.bf16.mxu0 0
    %468 = vmatpush2.bf16.msra.mxu0 0
    %469 = vmatprep.subr.bf16.mxu0 0
    %470 = vmatpush2.bf16.msra.mxu0 0
    %471 = vmatprep.subr.bf16.mxu0 0
    %472 = vmatpush2.bf16.msra.mxu0 0
    %473 = vmatprep.subr.bf16.mxu0 0
    %474 = vmatpush2.bf16.msra.mxu0 0
    %475 = vmatprep.mubr.bf16.mxu0 0
    %476 = vmatmul.mubr.bf16.gmra.mxu0 %v187
    %v477 = vpop.f32.mrf.mxu0
    %v478 = vadd.f32 0.0, %v477
    %v479 = vpop.f32.mrf.mxu0
    %v480 = vadd.f32 0.0, %v479
    %v481 = vpop.f32.mrf.mxu0
    %v482 = vadd.f32 0.0, %v481
    %v483 = vpop.f32.mrf.mxu0
    %v484 = vadd.f32 0.0, %v483
    %485 = vmatprep.mubr.bf16.mxu0 0
    %486 = vmatmul.mubr.bf16.gmra.mxu0 %v188
    %v487 = vpop.f32.mrf.mxu0
    %v488 = vadd.f32 0.0, %v487
    %v489 = vpop.f32.mrf.mxu0
    %v490 = vadd.f32 0.0, %v489
    %v491 = vpop.f32.mrf.mxu0
    %v492 = vadd.f32 0.0, %v491
    %v493 = vpop.f32.mrf.mxu0
    %v494 = vadd.f32 0.0, %v493
    %495 = vmatprep.mubr.bf16.mxu0 0
    %496 = vmatmul.mubr.bf16.gmra.mxu0 %v189
    %v497 = vpop.f32.mrf.mxu0
    %v498 = vadd.f32 0.0, %v497
    %v499 = vpop.f32.mrf.mxu0
    %v500 = vadd.f32 0.0, %v499
    %v501 = vpop.f32.mrf.mxu0
    %v502 = vadd.f32 0.0, %v501
    %v503 = vpop.f32.mrf.mxu0
    %v504 = vadd.f32 0.0, %v503
    %505 = vmatprep.mubr.bf16.mxu0 0
    %506 = vmatmul.mubr.bf16.gmra.mxu0 %v190
    %v507 = vpop.f32.mrf.mxu0
    %v508 = vadd.f32 0.0, %v507
    %v509 = vpop.f32.mrf.mxu0
    %v510 = vadd.f32 0.0, %v509
    %v511 = vpop.f32.mrf.mxu0
    %v512 = vadd.f32 0.0, %v511
    %v513 = vpop.f32.mrf.mxu0
    %v514 = vadd.f32 0.0, %v513
    %515 = vmatprep.mubr.bf16.mxu0 0
    %516 = vmatmul.mubr.bf16.gmra.mxu0 %v191
    %v517 = vpop.f32.mrf.mxu0
    %v518 = vadd.f32 0.0, %v517
    %v519 = vpop.f32.mrf.mxu0
    %v520 = vadd.f32 0.0, %v519
    %v521 = vpop.f32.mrf.mxu0
    %v522 = vadd.f32 0.0, %v521
    %v523 = vpop.f32.mrf.mxu0
    %v524 = vadd.f32 0.0, %v523
    %525 = vmatprep.mubr.bf16.mxu0 0
    %526 = vmatmul.mubr.bf16.gmra.mxu0 %v192
    %v527 = vpop.f32.mrf.mxu0
    %v528 = vadd.f32 0.0, %v527
    %v529 = vpop.f32.mrf.mxu0
    %v530 = vadd.f32 0.0, %v529
    %v531 = vpop.f32.mrf.mxu0
    %v532 = vadd.f32 0.0, %v531
    %v533 = vpop.f32.mrf.mxu0
    %v534 = vadd.f32 0.0, %v533
    %535 = vmatprep.mubr.bf16.mxu0 0
    %536 = vmatmul.mubr.bf16.gmra.mxu0 %v193
    %v537 = vpop.f32.mrf.mxu0
    %v538 = vadd.f32 0.0, %v537
    %v539 = vpop.f32.mrf.mxu0
    %v540 = vadd.f32 0.0, %v539
    %v541 = vpop.f32.mrf.mxu0
    %v542 = vadd.f32 0.0, %v541
    %v543 = vpop.f32.mrf.mxu0
    %v544 = vadd.f32 0.0, %v543
    %545 = vmatprep.mubr.bf16.mxu0 0
    %546 = vmatmul.mubr.bf16.gmra.mxu0 %v194
    %v547 = vpop.f32.mrf.mxu0
    %v548 = vadd.f32 0.0, %v547
    %v549 = vpop.f32.mrf.mxu0
    %v550 = vadd.f32 0.0, %v549
    %v551 = vpop.f32.mrf.mxu0
    %v552 = vadd.f32 0.0, %v551
    %v553 = vpop.f32.mrf.mxu0
    %v554 = vadd.f32 0.0, %v553
    %555 = vdwg.mxu0
    %556 = vmatprep.subr.bf16.mxu0 %v392
    %557 = vmatpush1.bf16.msra.mxu0 %v391
    %558 = vmatprep.subr.bf16.mxu0 %v386
    %559 = vmatpush1.bf16.msra.mxu0 %v385
    %560 = vmatprep.subr.bf16.mxu0 %v380
    %561 = vmatpush1.bf16.msra.mxu0 %v379
    %562 = vmatprep.subr.bf16.mxu0 %v374
    %563 = vmatpush1.bf16.msra.mxu0 %v373
    %564 = vmatprep.subr.bf16.mxu0 %v368
    %565 = vmatpush1.bf16.msra.mxu0 %v367
    %566 = vmatprep.subr.bf16.mxu0 %v362
    %567 = vmatpush1.bf16.msra.mxu0 %v361
    %568 = vmatprep.subr.bf16.mxu0 %v356
    %569 = vmatpush1.bf16.msra.mxu0 %v355
    %570 = vmatprep.subr.bf16.mxu0 %v350
    %571 = vmatpush1.bf16.msra.mxu0 %v349
    %572 = vmatprep.subr.bf16.mxu0 0
    %573 = vmatpush2.bf16.msra.mxu0 0
    %574 = vmatprep.subr.bf16.mxu0 0
    %575 = vmatpush2.bf16.msra.mxu0 0
    %576 = vmatprep.subr.bf16.mxu0 0
    %577 = vmatpush2.bf16.msra.mxu0 0
    %578 = vmatprep.subr.bf16.mxu0 0
    %579 = vmatpush2.bf16.msra.mxu0 0
    %580 = vmatprep.subr.bf16.mxu0 0
    %581 = vmatpush2.bf16.msra.mxu0 0
    %582 = vmatprep.subr.bf16.mxu0 0
    %583 = vmatpush2.bf16.msra.mxu0 0
    %584 = vmatprep.subr.bf16.mxu0 0
    %585 = vmatpush2.bf16.msra.mxu0 0
    %586 = vmatprep.subr.bf16.mxu0 0
    %587 = vmatpush2.bf16.msra.mxu0 0
    %588 = vmatprep.mubr.bf16.mxu0 0
    %589 = vmatmul.mubr.bf16.gmra.mxu0 %v187
    %v590 = vpop.f32.mrf.mxu0
    %v591 = vadd.f32 0.0, %v590
    %v592 = vpop.f32.mrf.mxu0
    %v593 = vadd.f32 0.0, %v592
    %v594 = vpop.f32.mrf.mxu0
    %v595 = vadd.f32 0.0, %v594
    %v596 = vpop.f32.mrf.mxu0
    %v597 = vadd.f32 0.0, %v596
    %598 = vmatprep.mubr.bf16.mxu0 0
    %599 = vmatmul.mubr.bf16.gmra.mxu0 %v188
    %v600 = vpop.f32.mrf.mxu0
    %v601 = vadd.f32 0.0, %v600
    %v602 = vpop.f32.mrf.mxu0
    %v603 = vadd.f32 0.0, %v602
    %v604 = vpop.f32.mrf.mxu0
    %v605 = vadd.f32 0.0, %v604
    %v606 = vpop.f32.mrf.mxu0
    %v607 = vadd.f32 0.0, %v606
    %608 = vmatprep.mubr.bf16.mxu0 0
    %609 = vmatmul.mubr.bf16.gmra.mxu0 %v189
    %v610 = vpop.f32.mrf.mxu0
    %v611 = vadd.f32 0.0, %v610
    %v612 = vpop.f32.mrf.mxu0
    %v613 = vadd.f32 0.0, %v612
    %v614 = vpop.f32.mrf.mxu0
    %v615 = vadd.f32 0.0, %v614
    %v616 = vpop.f32.mrf.mxu0
    %v617 = vadd.f32 0.0, %v616
    %618 = vmatprep.mubr.bf16.mxu0 0
    %619 = vmatmul.mubr.bf16.gmra.mxu0 %v190
    %v620 = vpop.f32.mrf.mxu0
    %v621 = vadd.f32 0.0, %v620
    %v622 = vpop.f32.mrf.mxu0
    %v623 = vadd.f32 0.0, %v622
    %v624 = vpop.f32.mrf.mxu0
    %v625 = vadd.f32 0.0, %v624
    %v626 = vpop.f32.mrf.mxu0
    %v627 = vadd.f32 0.0, %v626
    %628 = vmatprep.mubr.bf16.mxu0 0
    %629 = vmatmul.mubr.bf16.gmra.mxu0 %v191
    %v630 = vpop.f32.mrf.mxu0
    %v631 = vadd.f32 0.0, %v630
    %v632 = vpop.f32.mrf.mxu0
    %v633 = vadd.f32 0.0, %v632
    %v634 = vpop.f32.mrf.mxu0
    %v635 = vadd.f32 0.0, %v634
    %v636 = vpop.f32.mrf.mxu0
    %v637 = vadd.f32 0.0, %v636
    %638 = vmatprep.mubr.bf16.mxu0 0
    %639 = vmatmul.mubr.bf16.gmra.mxu0 %v192
    %v640 = vpop.f32.mrf.mxu0
    %v641 = vadd.f32 0.0, %v640
    %v642 = vpop.f32.mrf.mxu0
    %v643 = vadd.f32 0.0, %v642
    %v644 = vpop.f32.mrf.mxu0
    %v645 = vadd.f32 0.0, %v644
    %v646 = vpop.f32.mrf.mxu0
    %v647 = vadd.f32 0.0, %v646
    %648 = vmatprep.mubr.bf16.mxu0 0
    %649 = vmatmul.mubr.bf16.gmra.mxu0 %v193
    %v650 = vpop.f32.mrf.mxu0
    %v651 = vadd.f32 0.0, %v650
    %v652 = vpop.f32.mrf.mxu0
    %v653 = vadd.f32 0.0, %v652
    %v654 = vpop.f32.mrf.mxu0
    %v655 = vadd.f32 0.0, %v654
    %v656 = vpop.f32.mrf.mxu0
    %v657 = vadd.f32 0.0, %v656
    %658 = vmatprep.mubr.bf16.mxu0 0
    %659 = vmatmul.mubr.bf16.gmra.mxu0 %v194
    %v660 = vpop.f32.mrf.mxu0
    %v661 = vadd.f32 0.0, %v660
    %v662 = vpop.f32.mrf.mxu0
    %v663 = vadd.f32 0.0, %v662
    %v664 = vpop.f32.mrf.mxu0
    %v665 = vadd.f32 0.0, %v664
    %v666 = vpop.f32.mrf.mxu0
    %v667 = vadd.f32 0.0, %v666
    %668 = vdwg.mxu0
    %669 = vmatprep.subr.bf16.mxu0 %v394
    %670 = vmatpush1.bf16.msra.mxu0 %v393
    %671 = vmatprep.subr.bf16.mxu0 %v388
    %672 = vmatpush1.bf16.msra.mxu0 %v387
    %673 = vmatprep.subr.bf16.mxu0 %v382
    %674 = vmatpush1.bf16.msra.mxu0 %v381
    %675 = vmatprep.subr.bf16.mxu0 %v376
    %676 = vmatpush1.bf16.msra.mxu0 %v375
    %677 = vmatprep.subr.bf16.mxu0 %v370
    %678 = vmatpush1.bf16.msra.mxu0 %v369
    %679 = vmatprep.subr.bf16.mxu0 %v364
    %680 = vmatpush1.bf16.msra.mxu0 %v363
    %681 = vmatprep.subr.bf16.mxu0 %v358
    %682 = vmatpush1.bf16.msra.mxu0 %v357
    %683 = vmatprep.subr.bf16.mxu0 %v352
    %684 = vmatpush1.bf16.msra.mxu0 %v351
    %685 = vmatprep.subr.bf16.mxu0 0
    %686 = vmatpush2.bf16.msra.mxu0 0
    %687 = vmatprep.subr.bf16.mxu0 0
    %688 = vmatpush2.bf16.msra.mxu0 0
    %689 = vmatprep.subr.bf16.mxu0 0
    %690 = vmatpush2.bf16.msra.mxu0 0
    %691 = vmatprep.subr.bf16.mxu0 0
    %692 = vmatpush2.bf16.msra.mxu0 0
    %693 = vmatprep.subr.bf16.mxu0 0
    %694 = vmatpush2.bf16.msra.mxu0 0
    %695 = vmatprep.subr.bf16.mxu0 0
    %696 = vmatpush2.bf16.msra.mxu0 0
    %697 = vmatprep.subr.bf16.mxu0 0
    %698 = vmatpush2.bf16.msra.mxu0 0
    %699 = vmatprep.subr.bf16.mxu0 0
    %700 = vmatpush2.bf16.msra.mxu0 0
    %701 = vmatprep.mubr.bf16.mxu0 0
    %702 = vmatmul.mubr.bf16.gmra.mxu0 %v187
    %v703 = vpop.f32.mrf.mxu0
    %v704 = vadd.f32 0.0, %v703
    %v705 = vpop.f32.mrf.mxu0
    %v706 = vadd.f32 0.0, %v705
    %v707 = vpop.f32.mrf.mxu0
    %v708 = vadd.f32 0.0, %v707
    %v709 = vpop.f32.mrf.mxu0
    %v710 = vadd.f32 0.0, %v709
    %711 = vmatprep.mubr.bf16.mxu0 0
    %712 = vmatmul.mubr.bf16.gmra.mxu0 %v188
    %v713 = vpop.f32.mrf.mxu0
    %v714 = vadd.f32 0.0, %v713
    %v715 = vpop.f32.mrf.mxu0
    %v716 = vadd.f32 0.0, %v715
    %v717 = vpop.f32.mrf.mxu0
    %v718 = vadd.f32 0.0, %v717
    %v719 = vpop.f32.mrf.mxu0
    %v720 = vadd.f32 0.0, %v719
    %721 = vmatprep.mubr.bf16.mxu0 0
    %722 = vmatmul.mubr.bf16.gmra.mxu0 %v189
    %v723 = vpop.f32.mrf.mxu0
    %v724 = vadd.f32 0.0, %v723
    %v725 = vpop.f32.mrf.mxu0
    %v726 = vadd.f32 0.0, %v725
    %v727 = vpop.f32.mrf.mxu0
    %v728 = vadd.f32 0.0, %v727
    %v729 = vpop.f32.mrf.mxu0
    %v730 = vadd.f32 0.0, %v729
    %731 = vmatprep.mubr.bf16.mxu0 0
    %732 = vmatmul.mubr.bf16.gmra.mxu0 %v190
    %v733 = vpop.f32.mrf.mxu0
    %v734 = vadd.f32 0.0, %v733
    %v735 = vpop.f32.mrf.mxu0
    %v736 = vadd.f32 0.0, %v735
    %v737 = vpop.f32.mrf.mxu0
    %v738 = vadd.f32 0.0, %v737
    %v739 = vpop.f32.mrf.mxu0
    %v740 = vadd.f32 0.0, %v739
    %741 = vmatprep.mubr.bf16.mxu0 0
    %742 = vmatmul.mubr.bf16.gmra.mxu0 %v191
    %v743 = vpop.f32.mrf.mxu0
    %v744 = vadd.f32 0.0, %v743
    %v745 = vpop.f32.mrf.mxu0
    %v746 = vadd.f32 0.0, %v745
    %v747 = vpop.f32.mrf.mxu0
    %v748 = vadd.f32 0.0, %v747
    %v749 = vpop.f32.mrf.mxu0
    %v750 = vadd.f32 0.0, %v749
    %751 = vmatprep.mubr.bf16.mxu0 0
    %752 = vmatmul.mubr.bf16.gmra.mxu0 %v192
    %v753 = vpop.f32.mrf.mxu0
    %v754 = vadd.f32 0.0, %v753
    %v755 = vpop.f32.mrf.mxu0
    %v756 = vadd.f32 0.0, %v755
    %v757 = vpop.f32.mrf.mxu0
    %v758 = vadd.f32 0.0, %v757
    %v759 = vpop.f32.mrf.mxu0
    %v760 = vadd.f32 0.0, %v759
    %761 = vmatprep.mubr.bf16.mxu0 0
    %762 = vmatmul.mubr.bf16.gmra.mxu0 %v193
    %v763 = vpop.f32.mrf.mxu0
    %v764 = vadd.f32 0.0, %v763
    %v765 = vpop.f32.mrf.mxu0
    %v766 = vadd.f32 0.0, %v765
    %v767 = vpop.f32.mrf.mxu0
    %v768 = vadd.f32 0.0, %v767
    %v769 = vpop.f32.mrf.mxu0
    %v770 = vadd.f32 0.0, %v769
    %771 = vmatprep.mubr.bf16.mxu0 0
    %772 = vmatmul.mubr.bf16.gmra.mxu0 %v194
    %v773 = vpop.f32.mrf.mxu0
    %v774 = vadd.f32 0.0, %v773
    %v775 = vpop.f32.mrf.mxu0
    %v776 = vadd.f32 0.0, %v775
    %v777 = vpop.f32.mrf.mxu0
    %v778 = vadd.f32 0.0, %v777
    %v779 = vpop.f32.mrf.mxu0
    %v780 = vadd.f32 0.0, %v779
    %781 = vdwg.mxu0
    %v782 = vld [vmem:[#allocation7] sm:$0xff]
    %v783 = vld [vmem:[#allocation7 + $0x8] sm:$0xff]
    %v784 = vld [vmem:[#allocation7 + $0x10] sm:$0xff]
    %v785 = vld [vmem:[#allocation7 + $0x18] sm:$0xff]
    %v786 = vld [vmem:[#allocation7 + $0x20] sm:$0xff]
    %v787 = vld [vmem:[#allocation7 + $0x28] sm:$0xff]
    %v788 = vld [vmem:[#allocation7 + $0x30] sm:$0xff]
    %v789 = vld [vmem:[#allocation7 + $0x38] sm:$0xff]
    %v790 = vld [vmem:[#allocation7 + $0x40] sm:$0xff]
    %v791 = vld [vmem:[#allocation7 + $0x48] sm:$0xff]
    %v792 = vld [vmem:[#allocation7 + $0x50] sm:$0xff]
    %v793 = vld [vmem:[#allocation7 + $0x58] sm:$0xff]
    %v794 = vadd.f32 %v478, %v782
    %v795 = vadd.f32 %v480, %v783
    %v796 = vadd.f32 %v591, %v784
    %v797 = vadd.f32 %v593, %v785
    %v798 = vadd.f32 %v704, %v786
    %v799 = vadd.f32 %v706, %v787
    %v800 = vadd.f32 %v482, %v788
    %v801 = vadd.f32 %v484, %v789
    %v802 = vadd.f32 %v595, %v790
    %v803 = vadd.f32 %v597, %v791
    %v804 = vadd.f32 %v708, %v792
    %v805 = vadd.f32 %v710, %v793
    %v806 = vadd.f32 %v488, %v782
    %v807 = vadd.f32 %v490, %v783
    %v808 = vadd.f32 %v601, %v784
    %v809 = vadd.f32 %v603, %v785
    %v810 = vadd.f32 %v714, %v786
    %v811 = vadd.f32 %v716, %v787
    %v812 = vadd.f32 %v492, %v788
    %v813 = vadd.f32 %v494, %v789
    %v814 = vadd.f32 %v605, %v790
    %v815 = vadd.f32 %v607, %v791
    %v816 = vadd.f32 %v718, %v792
    %v817 = vadd.f32 %v720, %v793
    %v818 = vadd.f32 %v498, %v782
    %v819 = vadd.f32 %v500, %v783
    %v820 = vadd.f32 %v611, %v784
    %v821 = vadd.f32 %v613, %v785
    %v822 = vadd.f32 %v724, %v786
    %v823 = vadd.f32 %v726, %v787
    %v824 = vadd.f32 %v502, %v788
    %v825 = vadd.f32 %v504, %v789
    %v826 = vadd.f32 %v615, %v790
    %v827 = vadd.f32 %v617, %v791
    %v828 = vadd.f32 %v728, %v792
    %v829 = vadd.f32 %v730, %v793
    %v830 = vadd.f32 %v508, %v782
    %v831 = vadd.f32 %v510, %v783
    %v832 = vadd.f32 %v621, %v784
    %v833 = vadd.f32 %v623, %v785
    %v834 = vadd.f32 %v734, %v786
    %v835 = vadd.f32 %v736, %v787
    %v836 = vadd.f32 %v512, %v788
    %v837 = vadd.f32 %v514, %v789
    %v838 = vadd.f32 %v625, %v790
    %v839 = vadd.f32 %v627, %v791
    %v840 = vadd.f32 %v738, %v792
    %v841 = vadd.f32 %v740, %v793
    %v842 = vadd.f32 %v518, %v782
    %v843 = vadd.f32 %v520, %v783
    %v844 = vadd.f32 %v631, %v784
    %v845 = vadd.f32 %v633, %v785
    %v846 = vadd.f32 %v744, %v786
    %v847 = vadd.f32 %v746, %v787
    %v848 = vadd.f32 %v522, %v788
    %v849 = vadd.f32 %v524, %v789
    %v850 = vadd.f32 %v635, %v790
    %v851 = vadd.f32 %v637, %v791
    %v852 = vadd.f32 %v748, %v792
    %v853 = vadd.f32 %v750, %v793
    %v854 = vadd.f32 %v528, %v782
    %v855 = vadd.f32 %v530, %v783
    %v856 = vadd.f32 %v641, %v784
    %v857 = vadd.f32 %v643, %v785
    %v858 = vadd.f32 %v754, %v786
    %v859 = vadd.f32 %v756, %v787
    %v860 = vadd.f32 %v532, %v788
    %v861 = vadd.f32 %v534, %v789
    %v862 = vadd.f32 %v645, %v790
    %v863 = vadd.f32 %v647, %v791
    %v864 = vadd.f32 %v758, %v792
    %v865 = vadd.f32 %v760, %v793
    %v866 = vadd.f32 %v538, %v782
    %v867 = vadd.f32 %v540, %v783
    %v868 = vadd.f32 %v651, %v784
    %v869 = vadd.f32 %v653, %v785
    %v870 = vadd.f32 %v764, %v786
    %v871 = vadd.f32 %v766, %v787
    %v872 = vadd.f32 %v542, %v788
    %v873 = vadd.f32 %v544, %v789
    %v874 = vadd.f32 %v655, %v790
    %v875 = vadd.f32 %v657, %v791
    %v876 = vadd.f32 %v768, %v792
    %v877 = vadd.f32 %v770, %v793
    %v878 = vadd.f32 %v548, %v782
    %v879 = vadd.f32 %v550, %v783
    %v880 = vadd.f32 %v661, %v784
    %v881 = vadd.f32 %v663, %v785
    %v882 = vadd.f32 %v774, %v786
    %v883 = vadd.f32 %v776, %v787
    %v884 = vadd.f32 %v552, %v788
    %v885 = vadd.f32 %v554, %v789
    %v886 = vadd.f32 %v665, %v790
    %v887 = vadd.f32 %v667, %v791
    %v888 = vadd.f32 %v778, %v792
    %v889 = vadd.f32 %v780, %v793
    %v890 = vmax.f32 %v794, %v800
    %v891 = vrot.slane %v890, 4
    %v892 = vmax.f32 %v890, %v891
    %v893 = vrot.slane %v892, 2
    %v894 = vmax.f32 %v892, %v893
    %v895 = vrot.slane %v894, 1
    %v896 = vmax.f32 %v894, %v895
    %v897 = vmax.f32 %v795, %v801
    %v898 = vrot.slane %v897, 4
    %v899 = vmax.f32 %v897, %v898
    %v900 = vrot.slane %v899, 2
    %v901 = vmax.f32 %v899, %v900
    %v902 = vrot.slane %v901, 1
    %v903 = vmax.f32 %v901, %v902
    %v904 = vmax.f32 %v796, %v802
    %v905 = vrot.slane %v904, 4
    %v906 = vmax.f32 %v904, %v905
    %v907 = vrot.slane %v906, 2
    %v908 = vmax.f32 %v906, %v907
    %v909 = vrot.slane %v908, 1
    %v910 = vmax.f32 %v908, %v909
    %v911 = vmax.f32 %v797, %v803
    %v912 = vrot.slane %v911, 4
    %v913 = vmax.f32 %v911, %v912
    %v914 = vrot.slane %v913, 2
    %v915 = vmax.f32 %v913, %v914
    %v916 = vrot.slane %v915, 1
    %v917 = vmax.f32 %v915, %v916
    %v918 = vmax.f32 %v798, %v804
    %v919 = vrot.slane %v918, 4
    %v920 = vmax.f32 %v918, %v919
    %v921 = vrot.slane %v920, 2
    %v922 = vmax.f32 %v920, %v921
    %v923 = vrot.slane %v922, 1
    %v924 = vmax.f32 %v922, %v923
    %v925 = vmax.f32 %v799, %v805
    %v926 = vrot.slane %v925, 4
    %v927 = vmax.f32 %v925, %v926
    %v928 = vrot.slane %v927, 2
    %v929 = vmax.f32 %v927, %v928
    %v930 = vrot.slane %v929, 1
    %v931 = vmax.f32 %v929, %v930
    %v932 = vmax.f32 %v806, %v812
    %v933 = vrot.slane %v932, 4
    %v934 = vmax.f32 %v932, %v933
    %v935 = vrot.slane %v934, 2
    %v936 = vmax.f32 %v934, %v935
    %v937 = vrot.slane %v936, 1
    %v938 = vmax.f32 %v936, %v937
    %v939 = vmax.f32 %v807, %v813
    %v940 = vrot.slane %v939, 4
    %v941 = vmax.f32 %v939, %v940
    %v942 = vrot.slane %v941, 2
    %v943 = vmax.f32 %v941, %v942
    %v944 = vrot.slane %v943, 1
    %v945 = vmax.f32 %v943, %v944
    %v946 = vmax.f32 %v808, %v814
    %v947 = vrot.slane %v946, 4
    %v948 = vmax.f32 %v946, %v947
    %v949 = vrot.slane %v948, 2
    %v950 = vmax.f32 %v948, %v949
    %v951 = vrot.slane %v950, 1
    %v952 = vmax.f32 %v950, %v951
    %v953 = vmax.f32 %v809, %v815
    %v954 = vrot.slane %v953, 4
    %v955 = vmax.f32 %v953, %v954
    %v956 = vrot.slane %v955, 2
    %v957 = vmax.f32 %v955, %v956
    %v958 = vrot.slane %v957, 1
    %v959 = vmax.f32 %v957, %v958
    %v960 = vmax.f32 %v810, %v816
    %v961 = vrot.slane %v960, 4
    %v962 = vmax.f32 %v960, %v961
    %v963 = vrot.slane %v962, 2
    %v964 = vmax.f32 %v962, %v963
    %v965 = vrot.slane %v964, 1
    %v966 = vmax.f32 %v964, %v965
    %v967 = vmax.f32 %v811, %v817
    %v968 = vrot.slane %v967, 4
    %v969 = vmax.f32 %v967, %v968
    %v970 = vrot.slane %v969, 2
    %v971 = vmax.f32 %v969, %v970
    %v972 = vrot.slane %v971, 1
    %v973 = vmax.f32 %v971, %v972
    %v974 = vmax.f32 %v818, %v824
    %v975 = vrot.slane %v974, 4
    %v976 = vmax.f32 %v974, %v975
    %v977 = vrot.slane %v976, 2
    %v978 = vmax.f32 %v976, %v977
    %v979 = vrot.slane %v978, 1
    %v980 = vmax.f32 %v978, %v979
    %v981 = vmax.f32 %v819, %v825
    %v982 = vrot.slane %v981, 4
    %v983 = vmax.f32 %v981, %v982
    %v984 = vrot.slane %v983, 2
    %v985 = vmax.f32 %v983, %v984
    %v986 = vrot.slane %v985, 1
    %v987 = vmax.f32 %v985, %v986
    %v988 = vmax.f32 %v820, %v826
    %v989 = vrot.slane %v988, 4
    %v990 = vmax.f32 %v988, %v989
    %v991 = vrot.slane %v990, 2
    %v992 = vmax.f32 %v990, %v991
    %v993 = vrot.slane %v992, 1
    %v994 = vmax.f32 %v992, %v993
    %v995 = vmax.f32 %v821, %v827
    %v996 = vrot.slane %v995, 4
    %v997 = vmax.f32 %v995, %v996
    %v998 = vrot.slane %v997, 2
    %v999 = vmax.f32 %v997, %v998
    %v1000 = vrot.slane %v999, 1
    %v1001 = vmax.f32 %v999, %v1000
    %v1002 = vmax.f32 %v822, %v828
    %v1003 = vrot.slane %v1002, 4
    %v1004 = vmax.f32 %v1002, %v1003
    %v1005 = vrot.slane %v1004, 2
    %v1006 = vmax.f32 %v1004, %v1005
    %v1007 = vrot.slane %v1006, 1
    %v1008 = vmax.f32 %v1006, %v1007
    %v1009 = vmax.f32 %v823, %v829
    %v1010 = vrot.slane %v1009, 4
    %v1011 = vmax.f32 %v1009, %v1010
    %v1012 = vrot.slane %v1011, 2
    %v1013 = vmax.f32 %v1011, %v1012
    %v1014 = vrot.slane %v1013, 1
    %v1015 = vmax.f32 %v1013, %v1014
    %v1016 = vmax.f32 %v830, %v836
    %v1017 = vrot.slane %v1016, 4
    %v1018 = vmax.f32 %v1016, %v1017
    %v1019 = vrot.slane %v1018, 2
    %v1020 = vmax.f32 %v1018, %v1019
    %v1021 = vrot.slane %v1020, 1
    %v1022 = vmax.f32 %v1020, %v1021
    %v1023 = vmax.f32 %v831, %v837
    %v1024 = vrot.slane %v1023, 4
    %v1025 = vmax.f32 %v1023, %v1024
    %v1026 = vrot.slane %v1025, 2
    %v1027 = vmax.f32 %v1025, %v1026
    %v1028 = vrot.slane %v1027, 1
    %v1029 = vmax.f32 %v1027, %v1028
    %v1030 = vmax.f32 %v832, %v838
    %v1031 = vrot.slane %v1030, 4
    %v1032 = vmax.f32 %v1030, %v1031
    %v1033 = vrot.slane %v1032, 2
    %v1034 = vmax.f32 %v1032, %v1033
    %v1035 = vrot.slane %v1034, 1
    %v1036 = vmax.f32 %v1034, %v1035
    %v1037 = vmax.f32 %v833, %v839
    %v1038 = vrot.slane %v1037, 4
    %v1039 = vmax.f32 %v1037, %v1038
    %v1040 = vrot.slane %v1039, 2
    %v1041 = vmax.f32 %v1039, %v1040
    %v1042 = vrot.slane %v1041, 1
    %v1043 = vmax.f32 %v1041, %v1042
    %v1044 = vmax.f32 %v834, %v840
    %v1045 = vrot.slane %v1044, 4
    %v1046 = vmax.f32 %v1044, %v1045
    %v1047 = vrot.slane %v1046, 2
    %v1048 = vmax.f32 %v1046, %v1047
    %v1049 = vrot.slane %v1048, 1
    %v1050 = vmax.f32 %v1048, %v1049
    %v1051 = vmax.f32 %v835, %v841
    %v1052 = vrot.slane %v1051, 4
    %v1053 = vmax.f32 %v1051, %v1052
    %v1054 = vrot.slane %v1053, 2
    %v1055 = vmax.f32 %v1053, %v1054
    %v1056 = vrot.slane %v1055, 1
    %v1057 = vmax.f32 %v1055, %v1056
    %v1058 = vmax.f32 %v842, %v848
    %v1059 = vrot.slane %v1058, 4
    %v1060 = vmax.f32 %v1058, %v1059
    %v1061 = vrot.slane %v1060, 2
    %v1062 = vmax.f32 %v1060, %v1061
    %v1063 = vrot.slane %v1062, 1
    %v1064 = vmax.f32 %v1062, %v1063
    %v1065 = vmax.f32 %v843, %v849
    %v1066 = vrot.slane %v1065, 4
    %v1067 = vmax.f32 %v1065, %v1066
    %v1068 = vrot.slane %v1067, 2
    %v1069 = vmax.f32 %v1067, %v1068
    %v1070 = vrot.slane %v1069, 1
    %v1071 = vmax.f32 %v1069, %v1070
    %v1072 = vmax.f32 %v844, %v850
    %v1073 = vrot.slane %v1072, 4
    %v1074 = vmax.f32 %v1072, %v1073
    %v1075 = vrot.slane %v1074, 2
    %v1076 = vmax.f32 %v1074, %v1075
    %v1077 = vrot.slane %v1076, 1
    %v1078 = vmax.f32 %v1076, %v1077
    %v1079 = vmax.f32 %v845, %v851
    %v1080 = vrot.slane %v1079, 4
    %v1081 = vmax.f32 %v1079, %v1080
    %v1082 = vrot.slane %v1081, 2
    %v1083 = vmax.f32 %v1081, %v1082
    %v1084 = vrot.slane %v1083, 1
    %v1085 = vmax.f32 %v1083, %v1084
    %v1086 = vmax.f32 %v846, %v852
    %v1087 = vrot.slane %v1086, 4
    %v1088 = vmax.f32 %v1086, %v1087
    %v1089 = vrot.slane %v1088, 2
    %v1090 = vmax.f32 %v1088, %v1089
    %v1091 = vrot.slane %v1090, 1
    %v1092 = vmax.f32 %v1090, %v1091
    %v1093 = vmax.f32 %v847, %v853
    %v1094 = vrot.slane %v1093, 4
    %v1095 = vmax.f32 %v1093, %v1094
    %v1096 = vrot.slane %v1095, 2
    %v1097 = vmax.f32 %v1095, %v1096
    %v1098 = vrot.slane %v1097, 1
    %v1099 = vmax.f32 %v1097, %v1098
    %v1100 = vmax.f32 %v854, %v860
    %v1101 = vrot.slane %v1100, 4
    %v1102 = vmax.f32 %v1100, %v1101
    %v1103 = vrot.slane %v1102, 2
    %v1104 = vmax.f32 %v1102, %v1103
    %v1105 = vrot.slane %v1104, 1
    %v1106 = vmax.f32 %v1104, %v1105
    %v1107 = vmax.f32 %v855, %v861
    %v1108 = vrot.slane %v1107, 4
    %v1109 = vmax.f32 %v1107, %v1108
    %v1110 = vrot.slane %v1109, 2
    %v1111 = vmax.f32 %v1109, %v1110
    %v1112 = vrot.slane %v1111, 1
    %v1113 = vmax.f32 %v1111, %v1112
    %v1114 = vmax.f32 %v856, %v862
    %v1115 = vrot.slane %v1114, 4
    %v1116 = vmax.f32 %v1114, %v1115
    %v1117 = vrot.slane %v1116, 2
    %v1118 = vmax.f32 %v1116, %v1117
    %v1119 = vrot.slane %v1118, 1
    %v1120 = vmax.f32 %v1118, %v1119
    %v1121 = vmax.f32 %v857, %v863
    %v1122 = vrot.slane %v1121, 4
    %v1123 = vmax.f32 %v1121, %v1122
    %v1124 = vrot.slane %v1123, 2
    %v1125 = vmax.f32 %v1123, %v1124
    %v1126 = vrot.slane %v1125, 1
    %v1127 = vmax.f32 %v1125, %v1126
    %v1128 = vmax.f32 %v858, %v864
    %v1129 = vrot.slane %v1128, 4
    %v1130 = vmax.f32 %v1128, %v1129
    %v1131 = vrot.slane %v1130, 2
    %v1132 = vmax.f32 %v1130, %v1131
    %v1133 = vrot.slane %v1132, 1
    %v1134 = vmax.f32 %v1132, %v1133
    %v1135 = vmax.f32 %v859, %v865
    %v1136 = vrot.slane %v1135, 4
    %v1137 = vmax.f32 %v1135, %v1136
    %v1138 = vrot.slane %v1137, 2
    %v1139 = vmax.f32 %v1137, %v1138
    %v1140 = vrot.slane %v1139, 1
    %v1141 = vmax.f32 %v1139, %v1140
    %v1142 = vmax.f32 %v866, %v872
    %v1143 = vrot.slane %v1142, 4
    %v1144 = vmax.f32 %v1142, %v1143
    %v1145 = vrot.slane %v1144, 2
    %v1146 = vmax.f32 %v1144, %v1145
    %v1147 = vrot.slane %v1146, 1
    %v1148 = vmax.f32 %v1146, %v1147
    %v1149 = vmax.f32 %v867, %v873
    %v1150 = vrot.slane %v1149, 4
    %v1151 = vmax.f32 %v1149, %v1150
    %v1152 = vrot.slane %v1151, 2
    %v1153 = vmax.f32 %v1151, %v1152
    %v1154 = vrot.slane %v1153, 1
    %v1155 = vmax.f32 %v1153, %v1154
    %v1156 = vmax.f32 %v868, %v874
    %v1157 = vrot.slane %v1156, 4
    %v1158 = vmax.f32 %v1156, %v1157
    %v1159 = vrot.slane %v1158, 2
    %v1160 = vmax.f32 %v1158, %v1159
    %v1161 = vrot.slane %v1160, 1
    %v1162 = vmax.f32 %v1160, %v1161
    %v1163 = vmax.f32 %v869, %v875
    %v1164 = vrot.slane %v1163, 4
    %v1165 = vmax.f32 %v1163, %v1164
    %v1166 = vrot.slane %v1165, 2
    %v1167 = vmax.f32 %v1165, %v1166
    %v1168 = vrot.slane %v1167, 1
    %v1169 = vmax.f32 %v1167, %v1168
    %v1170 = vmax.f32 %v870, %v876
    %v1171 = vrot.slane %v1170, 4
    %v1172 = vmax.f32 %v1170, %v1171
    %v1173 = vrot.slane %v1172, 2
    %v1174 = vmax.f32 %v1172, %v1173
    %v1175 = vrot.slane %v1174, 1
    %v1176 = vmax.f32 %v1174, %v1175
    %v1177 = vmax.f32 %v871, %v877
    %v1178 = vrot.slane %v1177, 4
    %v1179 = vmax.f32 %v1177, %v1178
    %v1180 = vrot.slane %v1179, 2
    %v1181 = vmax.f32 %v1179, %v1180
    %v1182 = vrot.slane %v1181, 1
    %v1183 = vmax.f32 %v1181, %v1182
    %v1184 = vmax.f32 %v878, %v884
    %v1185 = vrot.slane %v1184, 4
    %v1186 = vmax.f32 %v1184, %v1185
    %v1187 = vrot.slane %v1186, 2
    %v1188 = vmax.f32 %v1186, %v1187
    %v1189 = vrot.slane %v1188, 1
    %v1190 = vmax.f32 %v1188, %v1189
    %v1191 = vmax.f32 %v879, %v885
    %v1192 = vrot.slane %v1191, 4
    %v1193 = vmax.f32 %v1191, %v1192
    %v1194 = vrot.slane %v1193, 2
    %v1195 = vmax.f32 %v1193, %v1194
    %v1196 = vrot.slane %v1195, 1
    %v1197 = vmax.f32 %v1195, %v1196
    %v1198 = vmax.f32 %v880, %v886
    %v1199 = vrot.slane %v1198, 4
    %v1200 = vmax.f32 %v1198, %v1199
    %v1201 = vrot.slane %v1200, 2
    %v1202 = vmax.f32 %v1200, %v1201
    %v1203 = vrot.slane %v1202, 1
    %v1204 = vmax.f32 %v1202, %v1203
    %v1205 = vmax.f32 %v881, %v887
    %v1206 = vrot.slane %v1205, 4
    %v1207 = vmax.f32 %v1205, %v1206
    %v1208 = vrot.slane %v1207, 2
    %v1209 = vmax.f32 %v1207, %v1208
    %v1210 = vrot.slane %v1209, 1
    %v1211 = vmax.f32 %v1209, %v1210
    %v1212 = vmax.f32 %v882, %v888
    %v1213 = vrot.slane %v1212, 4
    %v1214 = vmax.f32 %v1212, %v1213
    %v1215 = vrot.slane %v1214, 2
    %v1216 = vmax.f32 %v1214, %v1215
    %v1217 = vrot.slane %v1216, 1
    %v1218 = vmax.f32 %v1216, %v1217
    %v1219 = vmax.f32 %v883, %v889
    %v1220 = vrot.slane %v1219, 4
    %v1221 = vmax.f32 %v1219, %v1220
    %v1222 = vrot.slane %v1221, 2
    %v1223 = vmax.f32 %v1221, %v1222
    %v1224 = vrot.slane %v1223, 1
    %v1225 = vmax.f32 %v1223, %v1224
    %v1226 = vld [vmem:[#allocation8] sm:$0x3f]
    %v1228 = vlaneseq
    %v1229 = vshrl.u32 %v1228, 7
    %v1230 = vsub.s32 0, %v1229
    %v1231 = vrot.slane %v1226, %v1230
    %v1232 = vlaneseq
    %v1233 = vshrl.u32 %v1232, 7
    %v1234 = vsub.s32 1, %v1233
    %v1235 = vrot.slane %v1226, %v1234
    %v1236 = vlaneseq
    %v1237 = vshrl.u32 %v1236, 7
    %v1238 = vsub.s32 2, %v1237
    %v1239 = vrot.slane %v1226, %v1238
    %v1240 = vlaneseq
    %v1241 = vshrl.u32 %v1240, 7
    %v1242 = vsub.s32 3, %v1241
    %v1243 = vrot.slane %v1226, %v1242
    %v1244 = vlaneseq
    %v1245 = vshrl.u32 %v1244, 7
    %v1246 = vsub.s32 4, %v1245
    %v1247 = vrot.slane %v1226, %v1246
    %v1248 = vlaneseq
    %v1249 = vshrl.u32 %v1248, 7
    %v1250 = vsub.s32 5, %v1249
    %v1251 = vrot.slane %v1226, %v1250
    %v1258 = vadd.f32 %v896, %v1231
    %v1259 = vadd.f32 %v903, %v1235
    %v1260 = vadd.f32 %v910, %v1239
    %v1261 = vadd.f32 %v917, %v1243
    %v1262 = vadd.f32 %v924, %v1247
    %v1263 = vadd.f32 %v931, %v1251
    %v1264 = vadd.f32 %v938, %v1231
    %v1265 = vadd.f32 %v945, %v1235
    %v1266 = vadd.f32 %v952, %v1239
    %v1267 = vadd.f32 %v959, %v1243
    %v1268 = vadd.f32 %v966, %v1247
    %v1269 = vadd.f32 %v973, %v1251
    %v1270 = vadd.f32 %v980, %v1231
    %v1271 = vadd.f32 %v987, %v1235
    %v1272 = vadd.f32 %v994, %v1239
    %v1273 = vadd.f32 %v1001, %v1243
    %v1274 = vadd.f32 %v1008, %v1247
    %v1275 = vadd.f32 %v1015, %v1251
    %v1276 = vadd.f32 %v1022, %v1231
    %v1277 = vadd.f32 %v1029, %v1235
    %v1278 = vadd.f32 %v1036, %v1239
    %v1279 = vadd.f32 %v1043, %v1243
    %v1280 = vadd.f32 %v1050, %v1247
    %v1281 = vadd.f32 %v1057, %v1251
    %v1282 = vadd.f32 %v1064, %v1231
    %v1283 = vadd.f32 %v1071, %v1235
    %v1284 = vadd.f32 %v1078, %v1239
    %v1285 = vadd.f32 %v1085, %v1243
    %v1286 = vadd.f32 %v1092, %v1247
    %v1287 = vadd.f32 %v1099, %v1251
    %v1288 = vadd.f32 %v1106, %v1231
    %v1289 = vadd.f32 %v1113, %v1235
    %v1290 = vadd.f32 %v1120, %v1239
    %v1291 = vadd.f32 %v1127, %v1243
    %v1292 = vadd.f32 %v1134, %v1247
    %v1293 = vadd.f32 %v1141, %v1251
    %v1294 = vadd.f32 %v1148, %v1231
    %v1295 = vadd.f32 %v1155, %v1235
    %v1296 = vadd.f32 %v1162, %v1239
    %v1297 = vadd.f32 %v1169, %v1243
    %v1298 = vadd.f32 %v1176, %v1247
    %v1299 = vadd.f32 %v1183, %v1251
    %v1300 = vadd.f32 %v1190, %v1231
    %v1301 = vadd.f32 %v1197, %v1235
    %v1302 = vadd.f32 %v1204, %v1239
    %v1303 = vadd.f32 %v1211, %v1243
    %v1304 = vadd.f32 %v1218, %v1247
    %v1305 = vadd.f32 %v1225, %v1251
    %v1306 = vmax.f32 %v1258, 0.0
    %v1307 = vmax.f32 %v1259, 0.0
    %v1308 = vmax.f32 %v1260, 0.0
    %v1309 = vmax.f32 %v1261, 0.0
    %v1310 = vmax.f32 %v1262, 0.0
    %v1311 = vmax.f32 %v1263, 0.0
    %v1312 = vmax.f32 %v1264, 0.0
    %v1313 = vmax.f32 %v1265, 0.0
    %v1314 = vmax.f32 %v1266, 0.0
    %v1315 = vmax.f32 %v1267, 0.0
    %v1316 = vmax.f32 %v1268, 0.0
    %v1317 = vmax.f32 %v1269, 0.0
    %v1318 = vmax.f32 %v1270, 0.0
    %v1319 = vmax.f32 %v1271, 0.0
    %v1320 = vmax.f32 %v1272, 0.0
    %v1321 = vmax.f32 %v1273, 0.0
    %v1322 = vmax.f32 %v1274, 0.0
    %v1323 = vmax.f32 %v1275, 0.0
    %v1324 = vmax.f32 %v1276, 0.0
    %v1325 = vmax.f32 %v1277, 0.0
    %v1326 = vmax.f32 %v1278, 0.0
    %v1327 = vmax.f32 %v1279, 0.0
    %v1328 = vmax.f32 %v1280, 0.0
    %v1329 = vmax.f32 %v1281, 0.0
    %v1330 = vmax.f32 %v1282, 0.0
    %v1331 = vmax.f32 %v1283, 0.0
    %v1332 = vmax.f32 %v1284, 0.0
    %v1333 = vmax.f32 %v1285, 0.0
    %v1334 = vmax.f32 %v1286, 0.0
    %v1335 = vmax.f32 %v1287, 0.0
    %v1336 = vmax.f32 %v1288, 0.0
    %v1337 = vmax.f32 %v1289, 0.0
    %v1338 = vmax.f32 %v1290, 0.0
    %v1339 = vmax.f32 %v1291, 0.0
    %v1340 = vmax.f32 %v1292, 0.0
    %v1341 = vmax.f32 %v1293, 0.0
    %v1342 = vmax.f32 %v1294, 0.0
    %v1343 = vmax.f32 %v1295, 0.0
    %v1344 = vmax.f32 %v1296, 0.0
    %v1345 = vmax.f32 %v1297, 0.0
    %v1346 = vmax.f32 %v1298, 0.0
    %v1347 = vmax.f32 %v1299, 0.0
    %v1348 = vmax.f32 %v1300, 0.0
    %v1349 = vmax.f32 %v1301, 0.0
    %v1350 = vmax.f32 %v1302, 0.0
    %v1351 = vmax.f32 %v1303, 0.0
    %v1352 = vmax.f32 %v1304, 0.0
    %v1353 = vmax.f32 %v1305, 0.0
    %v1354 = vpack.c.bf16 %v1306, %v1306
    %v1355 = vpack.c.bf16 %v1307, %v1307
    %v1356 = vpack.c.bf16 %v1308, %v1308
    %v1357 = vpack.c.bf16 %v1309, %v1309
    %v1358 = vpack.c.bf16 %v1310, %v1310
    %v1359 = vpack.c.bf16 %v1311, %v1311
    %v1360 = vpack.c.bf16 %v1312, %v1312
    %v1361 = vpack.c.bf16 %v1313, %v1313
    %v1362 = vpack.c.bf16 %v1314, %v1314
    %v1363 = vpack.c.bf16 %v1315, %v1315
    %v1364 = vpack.c.bf16 %v1316, %v1316
    %v1365 = vpack.c.bf16 %v1317, %v1317
    %v1366 = vpack.c.bf16 %v1318, %v1318
    %v1367 = vpack.c.bf16 %v1319, %v1319
    %v1368 = vpack.c.bf16 %v1320, %v1320
    %v1369 = vpack.c.bf16 %v1321, %v1321
    %v1370 = vpack.c.bf16 %v1322, %v1322
    %v1371 = vpack.c.bf16 %v1323, %v1323
    %v1372 = vpack.c.bf16 %v1324, %v1324
    %v1373 = vpack.c.bf16 %v1325, %v1325
    %v1374 = vpack.c.bf16 %v1326, %v1326
    %v1375 = vpack.c.bf16 %v1327, %v1327
    %v1376 = vpack.c.bf16 %v1328, %v1328
    %v1377 = vpack.c.bf16 %v1329, %v1329
    %v1378 = vpack.c.bf16 %v1330, %v1330
    %v1379 = vpack.c.bf16 %v1331, %v1331
    %v1380 = vpack.c.bf16 %v1332, %v1332
    %v1381 = vpack.c.bf16 %v1333, %v1333
    %v1382 = vpack.c.bf16 %v1334, %v1334
    %v1383 = vpack.c.bf16 %v1335, %v1335
    %v1384 = vpack.c.bf16 %v1336, %v1336
    %v1385 = vpack.c.bf16 %v1337, %v1337
    %v1386 = vpack.c.bf16 %v1338, %v1338
    %v1387 = vpack.c.bf16 %v1339, %v1339
    %v1388 = vpack.c.bf16 %v1340, %v1340
    %v1389 = vpack.c.bf16 %v1341, %v1341
    %v1390 = vpack.c.bf16 %v1342, %v1342
    %v1391 = vpack.c.bf16 %v1343, %v1343
    %v1392 = vpack.c.bf16 %v1344, %v1344
    %v1393 = vpack.c.bf16 %v1345, %v1345
    %v1394 = vpack.c.bf16 %v1346, %v1346
    %v1395 = vpack.c.bf16 %v1347, %v1347
    %v1396 = vpack.c.bf16 %v1348, %v1348
    %v1397 = vpack.c.bf16 %v1349, %v1349
    %v1398 = vpack.c.bf16 %v1350, %v1350
    %v1399 = vpack.c.bf16 %v1351, %v1351
    %v1400 = vpack.c.bf16 %v1352, %v1352
    %v1401 = vpack.c.bf16 %v1353, %v1353
    %v1402 = vld [vmem:[#allocation10] sm:$0xf]
    %v1403 = vld [vmem:[#allocation10 + $0x4] sm:$0xf]
    %v1404 = vld [vmem:[#allocation10 + $0x8] sm:$0xf]
    %v1405 = vld [vmem:[#allocation10 + $0xc] sm:$0xf]
    %v1406 = vld [vmem:[#allocation10 + $0x10] sm:$0xf]
    %v1407 = vld [vmem:[#allocation10 + $0x14] sm:$0xf]
    %v1408 = vld [vmem:[#allocation10 + $0x18] sm:$0xf]
    %v1409 = vld [vmem:[#allocation10 + $0x1c] sm:$0xf]
    %v1410 = vld [vmem:[#allocation10 + $0x20] sm:$0xf]
    %v1411 = vld [vmem:[#allocation10 + $0x24] sm:$0xf]
    %v1412 = vld [vmem:[#allocation10 + $0x28] sm:$0xf]
    %v1413 = vld [vmem:[#allocation10 + $0x2c] sm:$0xf]
    %v1414 = vld [vmem:[#allocation10 + $0x30] sm:$0xf]
    %v1415 = vld [vmem:[#allocation10 + $0x34] sm:$0xf]
    %v1416 = vld [vmem:[#allocation10 + $0x38] sm:$0xf]
    %v1417 = vld [vmem:[#allocation10 + $0x3c] sm:$0xf]
    %v1418 = vld [vmem:[#allocation10 + $0x40] sm:$0xf]
    %v1419 = vld [vmem:[#allocation10 + $0x44] sm:$0xf]
    %v1420 = vld [vmem:[#allocation10 + $0x48] sm:$0xf]
    %v1421 = vld [vmem:[#allocation10 + $0x4c] sm:$0xf]
    %v1422 = vld [vmem:[#allocation10 + $0x50] sm:$0xf]
    %v1423 = vld [vmem:[#allocation10 + $0x54] sm:$0xf]
    %v1424 = vld [vmem:[#allocation10 + $0x58] sm:$0xf]
    %v1425 = vld [vmem:[#allocation10 + $0x5c] sm:$0xf]
    %v1426 = vld [vmem:[#allocation10 + $0x60] sm:$0xf]
    %v1427 = vld [vmem:[#allocation10 + $0x64] sm:$0xf]
    %v1428 = vld [vmem:[#allocation10 + $0x68] sm:$0xf]
    %v1429 = vld [vmem:[#allocation10 + $0x6c] sm:$0xf]
    %v1430 = vld [vmem:[#allocation10 + $0x70] sm:$0xf]
    %v1431 = vld [vmem:[#allocation10 + $0x74] sm:$0xf]
    %v1432 = vld [vmem:[#allocation10 + $0x78] sm:$0xf]
    %v1433 = vld [vmem:[#allocation10 + $0x7c] sm:$0xf]
    %v1434 = vld [vmem:[#allocation10 + $0x80] sm:$0xf]
    %v1435 = vld [vmem:[#allocation10 + $0x84] sm:$0xf]
    %v1436 = vld [vmem:[#allocation10 + $0x88] sm:$0xf]
    %v1437 = vld [vmem:[#allocation10 + $0x8c] sm:$0xf]
    %v1438 = vld [vmem:[#allocation10 + $0x90] sm:$0xf]
    %v1439 = vld [vmem:[#allocation10 + $0x94] sm:$0xf]
    %v1440 = vld [vmem:[#allocation10 + $0x98] sm:$0xf]
    %v1441 = vld [vmem:[#allocation10 + $0x9c] sm:$0xf]
    %v1442 = vld [vmem:[#allocation10 + $0xa0] sm:$0xf]
    %v1443 = vld [vmem:[#allocation10 + $0xa4] sm:$0xf]
    %v1444 = vld [vmem:[#allocation10 + $0xa8] sm:$0xf]
    %v1445 = vld [vmem:[#allocation10 + $0xac] sm:$0xf]
    %v1446 = vld [vmem:[#allocation10 + $0xb0] sm:$0xf]
    %v1447 = vld [vmem:[#allocation10 + $0xb4] sm:$0xf]
    %v1448 = vld [vmem:[#allocation10 + $0xb8] sm:$0xf]
    %v1449 = vld [vmem:[#allocation10 + $0xbc] sm:$0xf]
    %v1450 = vld [vmem:[#allocation10 + $0xc0] sm:$0xf]
    %v1451 = vld [vmem:[#allocation10 + $0xc4] sm:$0xf]
    %v1452 = vld [vmem:[#allocation10 + $0xc8] sm:$0xf]
    %v1453 = vld [vmem:[#allocation10 + $0xcc] sm:$0xf]
    %v1454 = vld [vmem:[#allocation10 + $0xd0] sm:$0xf]
    %v1455 = vld [vmem:[#allocation10 + $0xd4] sm:$0xf]
    %v1456 = vld [vmem:[#allocation10 + $0xd8] sm:$0xf]
    %v1457 = vld [vmem:[#allocation10 + $0xdc] sm:$0xf]
    %v1458 = vld [vmem:[#allocation10 + $0xe0] sm:$0xf]
    %v1459 = vld [vmem:[#allocation10 + $0xe4] sm:$0xf]
    %v1460 = vld [vmem:[#allocation10 + $0xe8] sm:$0xf]
    %v1461 = vld [vmem:[#allocation10 + $0xec] sm:$0xf]
    %v1462 = vld [vmem:[#allocation10 + $0xf0] sm:$0xf]
    %v1463 = vld [vmem:[#allocation10 + $0xf4] sm:$0xf]
    %v1464 = vld [vmem:[#allocation10 + $0xf8] sm:$0xf]
    %v1465 = vld [vmem:[#allocation10 + $0xfc] sm:$0xf]
    %v1466 = vld [vmem:[#allocation10 + $0x100] sm:$0xf]
    %v1467 = vld [vmem:[#allocation10 + $0x104] sm:$0xf]
    %v1468 = vld [vmem:[#allocation10 + $0x108] sm:$0xf]
    %v1469 = vld [vmem:[#allocation10 + $0x10c] sm:$0xf]
    %v1470 = vld [vmem:[#allocation10 + $0x110] sm:$0xf]
    %v1471 = vld [vmem:[#allocation10 + $0x114] sm:$0xf]
    %v1472 = vld [vmem:[#allocation10 + $0x118] sm:$0xf]
    %v1473 = vld [vmem:[#allocation10 + $0x11c] sm:$0xf]
    %v1474 = vld [vmem:[#allocation10 + $0x120] sm:$0xf]
    %v1475 = vld [vmem:[#allocation10 + $0x124] sm:$0xf]
    %v1476 = vld [vmem:[#allocation10 + $0x128] sm:$0xf]
    %v1477 = vld [vmem:[#allocation10 + $0x12c] sm:$0xf]
    %v1478 = vld [vmem:[#allocation10 + $0x130] sm:$0xf]
    %v1479 = vld [vmem:[#allocation10 + $0x134] sm:$0xf]
    %v1480 = vld [vmem:[#allocation10 + $0x138] sm:$0xf]
    %v1481 = vld [vmem:[#allocation10 + $0x13c] sm:$0xf]
    %v1482 = vld [vmem:[#allocation10 + $0x140] sm:$0xf]
    %v1483 = vld [vmem:[#allocation10 + $0x144] sm:$0xf]
    %v1484 = vld [vmem:[#allocation10 + $0x148] sm:$0xf]
    %v1485 = vld [vmem:[#allocation10 + $0x14c] sm:$0xf]
    %v1486 = vld [vmem:[#allocation10 + $0x150] sm:$0xf]
    %v1487 = vld [vmem:[#allocation10 + $0x154] sm:$0xf]
    %v1488 = vld [vmem:[#allocation10 + $0x158] sm:$0xf]
    %v1489 = vld [vmem:[#allocation10 + $0x15c] sm:$0xf]
    %v1490 = vld [vmem:[#allocation10 + $0x160] sm:$0xf]
    %v1491 = vld [vmem:[#allocation10 + $0x164] sm:$0xf]
    %v1492 = vld [vmem:[#allocation10 + $0x168] sm:$0xf]
    %v1493 = vld [vmem:[#allocation10 + $0x16c] sm:$0xf]
    %v1494 = vld [vmem:[#allocation10 + $0x170] sm:$0xf]
    %v1495 = vld [vmem:[#allocation10 + $0x174] sm:$0xf]
    %v1496 = vld [vmem:[#allocation10 + $0x178] sm:$0xf]
    %v1497 = vld [vmem:[#allocation10 + $0x17c] sm:$0xf]
    %v1498 = vld [vmem:[%s5] sm:$0x1]
    %v1500 = vlaneseq
    %v1501 = vshrl.u32 %v1500, 7
    %v1502 = vsub.s32 0, %v1501
    %v1503 = vrot.slane %v1498, %v1502
    %v1553 = vunpack.c.l.b16 %v1354
    %v1554 = vunpack.c.l.b16 %v1355
    %v1555 = vunpack.c.l.b16 %v1356
    %v1556 = vunpack.c.l.b16 %v1357
    %v1557 = vunpack.c.l.b16 %v1358
    %v1558 = vunpack.c.l.b16 %v1359
    %v1559 = vunpack.c.l.b16 %v1360
    %v1560 = vunpack.c.l.b16 %v1361
    %v1561 = vunpack.c.l.b16 %v1362
    %v1562 = vunpack.c.l.b16 %v1363
    %v1563 = vunpack.c.l.b16 %v1364
    %v1564 = vunpack.c.l.b16 %v1365
    %v1565 = vunpack.c.l.b16 %v1366
    %v1566 = vunpack.c.l.b16 %v1367
    %v1567 = vunpack.c.l.b16 %v1368
    %v1568 = vunpack.c.l.b16 %v1369
    %v1569 = vunpack.c.l.b16 %v1370
    %v1570 = vunpack.c.l.b16 %v1371
    %v1571 = vunpack.c.l.b16 %v1372
    %v1572 = vunpack.c.l.b16 %v1373
    %v1573 = vunpack.c.l.b16 %v1374
    %v1574 = vunpack.c.l.b16 %v1375
    %v1575 = vunpack.c.l.b16 %v1376
    %v1576 = vunpack.c.l.b16 %v1377
    %v1577 = vunpack.c.l.b16 %v1378
    %v1578 = vunpack.c.l.b16 %v1379
    %v1579 = vunpack.c.l.b16 %v1380
    %v1580 = vunpack.c.l.b16 %v1381
    %v1581 = vunpack.c.l.b16 %v1382
    %v1582 = vunpack.c.l.b16 %v1383
    %v1583 = vunpack.c.l.b16 %v1384
    %v1584 = vunpack.c.l.b16 %v1385
    %v1585 = vunpack.c.l.b16 %v1386
    %v1586 = vunpack.c.l.b16 %v1387
    %v1587 = vunpack.c.l.b16 %v1388
    %v1588 = vunpack.c.l.b16 %v1389
    %v1589 = vunpack.c.l.b16 %v1390
    %v1590 = vunpack.c.l.b16 %v1391
    %v1591 = vunpack.c.l.b16 %v1392
    %v1592 = vunpack.c.l.b16 %v1393
    %v1593 = vunpack.c.l.b16 %v1394
    %v1594 = vunpack.c.l.b16 %v1395
    %v1595 = vunpack.c.l.b16 %v1396
    %v1596 = vunpack.c.l.b16 %v1397
    %v1597 = vunpack.c.l.b16 %v1398
    %v1598 = vunpack.c.l.b16 %v1399
    %v1599 = vunpack.c.l.b16 %v1400
    %v1600 = vunpack.c.l.b16 %v1401
    %v1601 = vrot.slane %v1559, 7
    %vm1602 = vcmask 1041409
    %v1603 = vsel %vm1602, %v1601, %v1553
    %v1604 = vrot.slane %v1565, 6
    %vm1605 = vcmask 1042434
    %v1606 = vsel %vm1605, %v1604, %v1603
    %v1607 = vrot.slane %v1571, 5
    %vm1608 = vcmask 1043459
    %v1609 = vsel %vm1608, %v1607, %v1606
    %v1610 = vrot.slane %v1577, 4
    %vm1611 = vcmask 1044484
    %v1612 = vsel %vm1611, %v1610, %v1609
    %v1613 = vrot.slane %v1583, 3
    %vm1614 = vcmask 1045509
    %v1615 = vsel %vm1614, %v1613, %v1612
    %v1616 = vrot.slane %v1589, 2
    %vm1617 = vcmask 1046534
    %v1618 = vsel %vm1617, %v1616, %v1615
    %v1619 = vrot.slane %v1595, 1
    %vm1620 = vcmask 1047559
    %v1621 = vsel %vm1620, %v1619, %v1618
    %v1622 = vrot.slane %v1560, 7
    %v1623 = vsel %vm1602, %v1622, %v1554
    %v1624 = vrot.slane %v1566, 6
    %v1625 = vsel %vm1605, %v1624, %v1623
    %v1626 = vrot.slane %v1572, 5
    %v1627 = vsel %vm1608, %v1626, %v1625
    %v1628 = vrot.slane %v1578, 4
    %v1629 = vsel %vm1611, %v1628, %v1627
    %v1630 = vrot.slane %v1584, 3
    %v1631 = vsel %vm1614, %v1630, %v1629
    %v1632 = vrot.slane %v1590, 2
    %v1633 = vsel %vm1617, %v1632, %v1631
    %v1634 = vrot.slane %v1596, 1
    %v1635 = vsel %vm1620, %v1634, %v1633
    %v1636 = vrot.slane %v1561, 7
    %v1637 = vsel %vm1602, %v1636, %v1555
    %v1638 = vrot.slane %v1567, 6
    %v1639 = vsel %vm1605, %v1638, %v1637
    %v1640 = vrot.slane %v1573, 5
    %v1641 = vsel %vm1608, %v1640, %v1639
    %v1642 = vrot.slane %v1579, 4
    %v1643 = vsel %vm1611, %v1642, %v1641
    %v1644 = vrot.slane %v1585, 3
    %v1645 = vsel %vm1614, %v1644, %v1643
    %v1646 = vrot.slane %v1591, 2
    %v1647 = vsel %vm1617, %v1646, %v1645
    %v1648 = vrot.slane %v1597, 1
    %v1649 = vsel %vm1620, %v1648, %v1647
    %v1650 = vrot.slane %v1562, 7
    %v1651 = vsel %vm1602, %v1650, %v1556
    %v1652 = vrot.slane %v1568, 6
    %v1653 = vsel %vm1605, %v1652, %v1651
    %v1654 = vrot.slane %v1574, 5
    %v1655 = vsel %vm1608, %v1654, %v1653
    %v1656 = vrot.slane %v1580, 4
    %v1657 = vsel %vm1611, %v1656, %v1655
    %v1658 = vrot.slane %v1586, 3
    %v1659 = vsel %vm1614, %v1658, %v1657
    %v1660 = vrot.slane %v1592, 2
    %v1661 = vsel %vm1617, %v1660, %v1659
    %v1662 = vrot.slane %v1598, 1
    %v1663 = vsel %vm1620, %v1662, %v1661
    %v1664 = vrot.slane %v1563, 7
    %v1665 = vsel %vm1602, %v1664, %v1557
    %v1666 = vrot.slane %v1569, 6
    %v1667 = vsel %vm1605, %v1666, %v1665
    %v1668 = vrot.slane %v1575, 5
    %v1669 = vsel %vm1608, %v1668, %v1667
    %v1670 = vrot.slane %v1581, 4
    %v1671 = vsel %vm1611, %v1670, %v1669
    %v1672 = vrot.slane %v1587, 3
    %v1673 = vsel %vm1614, %v1672, %v1671
    %v1674 = vrot.slane %v1593, 2
    %v1675 = vsel %vm1617, %v1674, %v1673
    %v1676 = vrot.slane %v1599, 1
    %v1677 = vsel %vm1620, %v1676, %v1675
    %v1678 = vrot.slane %v1564, 7
    %v1679 = vsel %vm1602, %v1678, %v1558
    %v1680 = vrot.slane %v1570, 6
    %v1681 = vsel %vm1605, %v1680, %v1679
    %v1682 = vrot.slane %v1576, 5
    %v1683 = vsel %vm1608, %v1682, %v1681
    %v1684 = vrot.slane %v1582, 4
    %v1685 = vsel %vm1611, %v1684, %v1683
    %v1686 = vrot.slane %v1588, 3
    %v1687 = vsel %vm1614, %v1686, %v1685
    %v1688 = vrot.slane %v1594, 2
    %v1689 = vsel %vm1617, %v1688, %v1687
    %v1690 = vrot.slane %v1600, 1
    %v1691 = vsel %vm1620, %v1690, %v1689
    %v1692 = vpack.c.b16 %v1621, %v1621
    %v1693 = vpack.c.b16 %v1635, %v1635
    %v1694 = vpack.c.b16 %v1649, %v1649
    %v1695 = vpack.c.b16 %v1663, %v1663
    %v1696 = vpack.c.b16 %v1677, %v1677
    %v1697 = vpack.c.b16 %v1691, %v1691
    %v1800 = vunpack.c.l.b16 %v1402
    %v1801 = vunpack.c.l.b16 %v1403
    %v1802 = vunpack.c.l.b16 %v1404
    %v1803 = vunpack.c.l.b16 %v1405
    %v1804 = vunpack.c.l.b16 %v1406
    %v1805 = vunpack.c.l.b16 %v1407
    %v1806 = vunpack.c.l.b16 %v1408
    %v1807 = vunpack.c.l.b16 %v1409
    %v1808 = vunpack.c.l.b16 %v1410
    %v1809 = vunpack.c.l.b16 %v1411
    %v1810 = vunpack.c.l.b16 %v1412
    %v1811 = vunpack.c.l.b16 %v1413
    %v1812 = vunpack.c.l.b16 %v1414
    %v1813 = vunpack.c.l.b16 %v1415
    %v1814 = vunpack.c.l.b16 %v1416
    %v1815 = vunpack.c.l.b16 %v1417
    %v1816 = vunpack.c.l.b16 %v1418
    %v1817 = vunpack.c.l.b16 %v1419
    %v1818 = vunpack.c.l.b16 %v1420
    %v1819 = vunpack.c.l.b16 %v1421
    %v1820 = vunpack.c.l.b16 %v1422
    %v1821 = vunpack.c.l.b16 %v1423
    %v1822 = vunpack.c.l.b16 %v1424
    %v1823 = vunpack.c.l.b16 %v1425
    %v1824 = vunpack.c.l.b16 %v1426
    %v1825 = vunpack.c.l.b16 %v1427
    %v1826 = vunpack.c.l.b16 %v1428
    %v1827 = vunpack.c.l.b16 %v1429
    %v1828 = vunpack.c.l.b16 %v1430
    %v1829 = vunpack.c.l.b16 %v1431
    %v1830 = vunpack.c.l.b16 %v1432
    %v1831 = vunpack.c.l.b16 %v1433
    %v1832 = vunpack.c.l.b16 %v1434
    %v1833 = vunpack.c.l.b16 %v1435
    %v1834 = vunpack.c.l.b16 %v1436
    %v1835 = vunpack.c.l.b16 %v1437
    %v1836 = vunpack.c.l.b16 %v1438
    %v1837 = vunpack.c.l.b16 %v1439
    %v1838 = vunpack.c.l.b16 %v1440
    %v1839 = vunpack.c.l.b16 %v1441
    %v1840 = vunpack.c.l.b16 %v1442
    %v1841 = vunpack.c.l.b16 %v1443
    %v1842 = vunpack.c.l.b16 %v1444
    %v1843 = vunpack.c.l.b16 %v1445
    %v1844 = vunpack.c.l.b16 %v1446
    %v1845 = vunpack.c.l.b16 %v1447
    %v1846 = vunpack.c.l.b16 %v1448
    %v1847 = vunpack.c.l.b16 %v1449
    %v1848 = vunpack.c.l.b16 %v1450
    %v1849 = vunpack.c.l.b16 %v1451
    %v1850 = vunpack.c.l.b16 %v1452
    %v1851 = vunpack.c.l.b16 %v1453
    %v1852 = vunpack.c.l.b16 %v1454
    %v1853 = vunpack.c.l.b16 %v1455
    %v1854 = vunpack.c.l.b16 %v1456
    %v1855 = vunpack.c.l.b16 %v1457
    %v1856 = vunpack.c.l.b16 %v1458
    %v1857 = vunpack.c.l.b16 %v1459
    %v1858 = vunpack.c.l.b16 %v1460
    %v1859 = vunpack.c.l.b16 %v1461
    %v1860 = vunpack.c.l.b16 %v1462
    %v1861 = vunpack.c.l.b16 %v1463
    %v1862 = vunpack.c.l.b16 %v1464
    %v1863 = vunpack.c.l.b16 %v1465
    %v1864 = vunpack.c.l.b16 %v1466
    %v1865 = vunpack.c.l.b16 %v1467
    %v1866 = vunpack.c.l.b16 %v1468
    %v1867 = vunpack.c.l.b16 %v1469
    %v1868 = vunpack.c.l.b16 %v1470
    %v1869 = vunpack.c.l.b16 %v1471
    %v1870 = vunpack.c.l.b16 %v1472
    %v1871 = vunpack.c.l.b16 %v1473
    %v1872 = vunpack.c.l.b16 %v1474
    %v1873 = vunpack.c.l.b16 %v1475
    %v1874 = vunpack.c.l.b16 %v1476
    %v1875 = vunpack.c.l.b16 %v1477
    %v1876 = vunpack.c.l.b16 %v1478
    %v1877 = vunpack.c.l.b16 %v1479
    %v1878 = vunpack.c.l.b16 %v1480
    %v1879 = vunpack.c.l.b16 %v1481
    %v1880 = vunpack.c.l.b16 %v1482
    %v1881 = vunpack.c.l.b16 %v1483
    %v1882 = vunpack.c.l.b16 %v1484
    %v1883 = vunpack.c.l.b16 %v1485
    %v1884 = vunpack.c.l.b16 %v1486
    %v1885 = vunpack.c.l.b16 %v1487
    %v1886 = vunpack.c.l.b16 %v1488
    %v1887 = vunpack.c.l.b16 %v1489
    %v1888 = vunpack.c.l.b16 %v1490
    %v1889 = vunpack.c.l.b16 %v1491
    %v1890 = vunpack.c.l.b16 %v1492
    %v1891 = vunpack.c.l.b16 %v1493
    %v1892 = vunpack.c.l.b16 %v1494
    %v1893 = vunpack.c.l.b16 %v1495
    %v1894 = vunpack.c.l.b16 %v1496
    %v1895 = vunpack.c.l.b16 %v1497
    %v1896 = vpack.c.b16 %v1801, %v1800
    %v1897 = vpack.c.b16 %v1803, %v1802
    %v1898 = vpack.c.b16 %v1805, %v1804
    %v1899 = vpack.c.b16 %v1807, %v1806
    %v1900 = vpack.c.b16 %v1809, %v1808
    %v1901 = vpack.c.b16 %v1811, %v1810
    %v1902 = vpack.c.b16 %v1813, %v1812
    %v1903 = vpack.c.b16 %v1815, %v1814
    %v1904 = vpack.c.b16 %v1817, %v1816
    %v1905 = vpack.c.b16 %v1819, %v1818
    %v1906 = vpack.c.b16 %v1821, %v1820
    %v1907 = vpack.c.b16 %v1823, %v1822
    %v1908 = vpack.c.b16 %v1825, %v1824
    %v1909 = vpack.c.b16 %v1827, %v1826
    %v1910 = vpack.c.b16 %v1829, %v1828
    %v1911 = vpack.c.b16 %v1831, %v1830
    %v1912 = vpack.c.b16 %v1833, %v1832
    %v1913 = vpack.c.b16 %v1835, %v1834
    %v1914 = vpack.c.b16 %v1837, %v1836
    %v1915 = vpack.c.b16 %v1839, %v1838
    %v1916 = vpack.c.b16 %v1841, %v1840
    %v1917 = vpack.c.b16 %v1843, %v1842
    %v1918 = vpack.c.b16 %v1845, %v1844
    %v1919 = vpack.c.b16 %v1847, %v1846
    %v1920 = vpack.c.b16 %v1849, %v1848
    %v1921 = vpack.c.b16 %v1851, %v1850
    %v1922 = vpack.c.b16 %v1853, %v1852
    %v1923 = vpack.c.b16 %v1855, %v1854
    %v1924 = vpack.c.b16 %v1857, %v1856
    %v1925 = vpack.c.b16 %v1859, %v1858
    %v1926 = vpack.c.b16 %v1861, %v1860
    %v1927 = vpack.c.b16 %v1863, %v1862
    %v1928 = vpack.c.b16 %v1865, %v1864
    %v1929 = vpack.c.b16 %v1867, %v1866
    %v1930 = vpack.c.b16 %v1869, %v1868
    %v1931 = vpack.c.b16 %v1871, %v1870
    %v1932 = vpack.c.b16 %v1873, %v1872
    %v1933 = vpack.c.b16 %v1875, %v1874
    %v1934 = vpack.c.b16 %v1877, %v1876
    %v1935 = vpack.c.b16 %v1879, %v1878
    %v1936 = vpack.c.b16 %v1881, %v1880
    %v1937 = vpack.c.b16 %v1883, %v1882
    %v1938 = vpack.c.b16 %v1885, %v1884
    %v1939 = vpack.c.b16 %v1887, %v1886
    %v1940 = vpack.c.b16 %v1889, %v1888
    %v1941 = vpack.c.b16 %v1891, %v1890
    %v1942 = vpack.c.b16 %v1893, %v1892
    %v1943 = vpack.c.b16 %v1895, %v1894
    %1992 = vmatprep.subr.bf16.mxu0 0
    %1993 = vmatpush1.bf16.msra.mxu0 %v1903
    %1994 = vmatprep.subr.bf16.mxu0 0
    %1995 = vmatpush1.bf16.msra.mxu0 %v1902
    %1996 = vmatprep.subr.bf16.mxu0 0
    %1997 = vmatpush1.bf16.msra.mxu0 %v1901
    %1998 = vmatprep.subr.bf16.mxu0 0
    %1999 = vmatpush1.bf16.msra.mxu0 %v1900
    %2000 = vmatprep.subr.bf16.mxu0 0
    %2001 = vmatpush1.bf16.msra.mxu0 %v1899
    %2002 = vmatprep.subr.bf16.mxu0 0
    %2003 = vmatpush1.bf16.msra.mxu0 %v1898
    %2004 = vmatprep.subr.bf16.mxu0 0
    %2005 = vmatpush1.bf16.msra.mxu0 %v1897
    %2006 = vmatprep.subr.bf16.mxu0 0
    %2007 = vmatpush1.bf16.msra.mxu0 %v1896
    %2008 = vmatprep.subr.bf16.mxu0 0
    %2009 = vmatpush2.bf16.msra.mxu0 %v1911
    %2010 = vmatprep.subr.bf16.mxu0 0
    %2011 = vmatpush2.bf16.msra.mxu0 %v1910
    %2012 = vmatprep.subr.bf16.mxu0 0
    %2013 = vmatpush2.bf16.msra.mxu0 %v1909
    %2014 = vmatprep.subr.bf16.mxu0 0
    %2015 = vmatpush2.bf16.msra.mxu0 %v1908
    %2016 = vmatprep.subr.bf16.mxu0 0
    %2017 = vmatpush2.bf16.msra.mxu0 %v1907
    %2018 = vmatprep.subr.bf16.mxu0 0
    %2019 = vmatpush2.bf16.msra.mxu0 %v1906
    %2020 = vmatprep.subr.bf16.mxu0 0
    %2021 = vmatpush2.bf16.msra.mxu0 %v1905
    %2022 = vmatprep.subr.bf16.mxu0 0
    %2023 = vmatpush2.bf16.msra.mxu0 %v1904
    %2024 = vmatprep.mubr.bf16.mxu0 %v1693
    %2025 = vmatmul.mubr.bf16.gmra.mxu0 %v1692
    %v2026 = vpop.f32.mrf.mxu0
    %v2027 = vadd.f32 %v1503, %v2026
    %v2028 = vpop.f32.mrf.mxu0
    %v2029 = vpop.f32.mrf.mxu0
    %v2030 = vpop.f32.mrf.mxu0
    %2031 = vdwg.mxu0
    %2032 = vmatprep.subr.bf16.mxu0 0
    %2033 = vmatpush1.bf16.msra.mxu0 %v1919
    %2034 = vmatprep.subr.bf16.mxu0 0
    %2035 = vmatpush1.bf16.msra.mxu0 %v1918
    %2036 = vmatprep.subr.bf16.mxu0 0
    %2037 = vmatpush1.bf16.msra.mxu0 %v1917
    %2038 = vmatprep.subr.bf16.mxu0 0
    %2039 = vmatpush1.bf16.msra.mxu0 %v1916
    %2040 = vmatprep.subr.bf16.mxu0 0
    %2041 = vmatpush1.bf16.msra.mxu0 %v1915
    %2042 = vmatprep.subr.bf16.mxu0 0
    %2043 = vmatpush1.bf16.msra.mxu0 %v1914
    %2044 = vmatprep.subr.bf16.mxu0 0
    %2045 = vmatpush1.bf16.msra.mxu0 %v1913
    %2046 = vmatprep.subr.bf16.mxu0 0
    %2047 = vmatpush1.bf16.msra.mxu0 %v1912
    %2048 = vmatprep.subr.bf16.mxu0 0
    %2049 = vmatpush2.bf16.msra.mxu0 %v1927
    %2050 = vmatprep.subr.bf16.mxu0 0
    %2051 = vmatpush2.bf16.msra.mxu0 %v1926
    %2052 = vmatprep.subr.bf16.mxu0 0
    %2053 = vmatpush2.bf16.msra.mxu0 %v1925
    %2054 = vmatprep.subr.bf16.mxu0 0
    %2055 = vmatpush2.bf16.msra.mxu0 %v1924
    %2056 = vmatprep.subr.bf16.mxu0 0
    %2057 = vmatpush2.bf16.msra.mxu0 %v1923
    %2058 = vmatprep.subr.bf16.mxu0 0
    %2059 = vmatpush2.bf16.msra.mxu0 %v1922
    %2060 = vmatprep.subr.bf16.mxu0 0
    %2061 = vmatpush2.bf16.msra.mxu0 %v1921
    %2062 = vmatprep.subr.bf16.mxu0 0
    %2063 = vmatpush2.bf16.msra.mxu0 %v1920
    %2064 = vmatprep.mubr.bf16.mxu0 %v1695
    %2065 = vmatmul.mubr.bf16.gmra.mxu0 %v1694
    %v2066 = vpop.f32.mrf.mxu0
    %v2067 = vadd.f32 %v2027, %v2066
    %v2068 = vpop.f32.mrf.mxu0
    %v2069 = vpop.f32.mrf.mxu0
    %v2070 = vpop.f32.mrf.mxu0
    %2071 = vdwg.mxu0
    %2072 = vmatprep.subr.bf16.mxu0 0
    %2073 = vmatpush1.bf16.msra.mxu0 %v1935
    %2074 = vmatprep.subr.bf16.mxu0 0
    %2075 = vmatpush1.bf16.msra.mxu0 %v1934
    %2076 = vmatprep.subr.bf16.mxu0 0
    %2077 = vmatpush1.bf16.msra.mxu0 %v1933
    %2078 = vmatprep.subr.bf16.mxu0 0
    %2079 = vmatpush1.bf16.msra.mxu0 %v1932
    %2080 = vmatprep.subr.bf16.mxu0 0
    %2081 = vmatpush1.bf16.msra.mxu0 %v1931
    %2082 = vmatprep.subr.bf16.mxu0 0
    %2083 = vmatpush1.bf16.msra.mxu0 %v1930
    %2084 = vmatprep.subr.bf16.mxu0 0
    %2085 = vmatpush1.bf16.msra.mxu0 %v1929
    %2086 = vmatprep.subr.bf16.mxu0 0
    %2087 = vmatpush1.bf16.msra.mxu0 %v1928
    %2088 = vmatprep.subr.bf16.mxu0 0
    %2089 = vmatpush2.bf16.msra.mxu0 %v1943
    %2090 = vmatprep.subr.bf16.mxu0 0
    %2091 = vmatpush2.bf16.msra.mxu0 %v1942
    %2092 = vmatprep.subr.bf16.mxu0 0
    %2093 = vmatpush2.bf16.msra.mxu0 %v1941
    %2094 = vmatprep.subr.bf16.mxu0 0
    %2095 = vmatpush2.bf16.msra.mxu0 %v1940
    %2096 = vmatprep.subr.bf16.mxu0 0
    %2097 = vmatpush2.bf16.msra.mxu0 %v1939
    %2098 = vmatprep.subr.bf16.mxu0 0
    %2099 = vmatpush2.bf16.msra.mxu0 %v1938
    %2100 = vmatprep.subr.bf16.mxu0 0
    %2101 = vmatpush2.bf16.msra.mxu0 %v1937
    %2102 = vmatprep.subr.bf16.mxu0 0
    %2103 = vmatpush2.bf16.msra.mxu0 %v1936
    %2104 = vmatprep.mubr.bf16.mxu0 %v1697
    %2105 = vmatmul.mubr.bf16.gmra.mxu0 %v1696
    %v2106 = vpop.f32.mrf.mxu0
    %v2107 = vadd.f32 %v2067, %v2106
    %v2108 = vpop.f32.mrf.mxu0
    %v2109 = vpop.f32.mrf.mxu0
    %v2110 = vpop.f32.mrf.mxu0
    %2111 = vdwg.mxu0
    %v2112 = vmax.f32 %v2107, 0.0
    %2113 = vst [vmem:[#allocation11] sm:$0xff] %v2112
    // Predicated region
    $region46: #{tpu_custom_call.1} parent=1 // pred_check
      _
    $region47: #{tpu_custom_call.1} parent=1 // pred_check_branch
      %2115 = sbr.rel (0) target = $region49
    $region48: #{tpu_custom_call.1} parent=1 // pred_region
      %s2117 = ssub.s32 128, 128
      %2118 = vsyncadd [#allocation4], %s2117
      %s2120 = sshll.u32 [#allocation11], 4
      %s2121 = int_to_ptr.vmem [resolvable:$true] %s2120
      %2123 = dma.vmem_to_hbm [thread:$0]  %s2121, 128, %s6, [#allocation4]
    $region49: #{tpu_custom_call.1} parent=1 // pred_fallthru
      _
    // Predicated region
    $region50: #{tpu_custom_call.1} parent=1 // pred_check
      _
    $region51: #{tpu_custom_call.1} parent=1 // pred_check_branch
      %2125 = sbr.rel (0) target = $region53
    $region52: #{tpu_custom_call.1} parent=1 // pred_region
      %2126 = dma.done [#allocation4], 128
    $region53: #{tpu_custom_call.1} parent=1 // pred_fallthru
      _
    %2127 = vsyncpa [#allocation3], 1
    %2128 = vsyncpa [#allocation6], 1
    %2129 = vsyncpa [#allocation9], 1
    %2130 = vsyncpa [#allocation4], 1

</llo_original>
